<compile_context>
chip_gen: v6e
topology: v6e:2x2x1
jax: 0.10.0
libtpu: 0.0.40
codegen_flags: <defaults>
</compile_context>

<pallas_src>
import functools

import jax
import jax.numpy as jnp
from jax.experimental import pallas as pl
from jax.experimental.pallas import tpu as pltpu


def _fused_attention_kernel(x_ref, wqkv_ref, wout_ref, bout_ref, o_ref,
                            qkv_ref, acc_ref, *, heads, dim_head, bt, n, dim):
    """Fused attention for one block of Bt (b,p)-items.

    x_ref    : (Bt, n, dim)     bf16 input tile
    wqkv_ref : (dim, 3*inner)   bf16 qkv weight (1/sqrt(d) pre-folded, grid-invariant)
    wout_ref : (inner, dim)     bf16 output projection weight (grid-invariant)
    bout_ref : (1, dim)         f32 output projection bias (grid-invariant)
    o_ref    : (Bt, n, dim)     bf16 output tile
    qkv_ref  : (Bt*n, 3*inner)  bf16 VMEM scratch for the fused QKV projection
    acc_ref  : (Bt*n, dim)      f32 VMEM scratch accumulating the output projection
    """
    d = dim_head
    inner = heads * d
    rows = bt * n

    x = x_ref[...].reshape(rows, dim)                          # (Bt*n, dim) bf16

    # Single MXU projection for q, k, v of ALL items & heads.  Result is
    # ref-resident bf16 (one cast, bounded live range across the head loop).
    qkv_ref[...] = jnp.dot(
        x, wqkv_ref[...], preferred_element_type=jnp.float32
    ).astype(jnp.bfloat16)

    for h in range(heads):      # heads is static -> unrolled at trace time
        q = qkv_ref[:, 0 * inner + h * d: 0 * inner + (h + 1) * d].reshape(bt, n, d)
        k = qkv_ref[:, 1 * inner + h * d: 1 * inner + (h + 1) * d].reshape(bt, n, d)
        v = qkv_ref[:, 2 * inner + h * d: 2 * inner + (h + 1) * d].reshape(bt, n, d)

        # q @ k^T per item, contracting on d (batched dot_general, no transpose).
        dots = jnp.einsum("bqd,bkd->bqk", q, k,
                          preferred_element_type=jnp.float32)  # (Bt, n, n) f32

        # Numerically-stable softmax numerator in f32; normalization deferred
        # until AFTER the P@V matmul (n*d multiplies instead of n*n per head).
        m = jnp.max(dots, axis=-1, keepdims=True)
        e = jnp.exp(dots - m)                                  # (Bt, n, n) f32
        denom = jnp.sum(e, axis=-1, keepdims=True)             # (Bt, n, 1) f32

        pv = jnp.einsum("bqk,bkd->bqd", e.astype(jnp.bfloat16), v,
                        preferred_element_type=jnp.float32)    # (Bt, n, d) f32
        out_h = pv * pl.reciprocal(denom, approx=True)         # (Bt, n, d) f32

        # Fused output projection: out_concat @ Wo == sum_h out_h @ Wo[h*d:(h+1)*d].
        contrib = jnp.dot(out_h.reshape(rows, d).astype(jnp.bfloat16),
                          wout_ref[h * d:(h + 1) * d, :],
                          preferred_element_type=jnp.float32)  # (Bt*n, dim) f32
        if h == 0:
            acc_ref[...] = contrib      # VMEM-resident accumulator (no vreg spill)
        else:
            acc_ref[...] += contrib

    # Bias add in f32, single bf16 cast on the final (lane-dense) store.
    o_ref[...] = (acc_ref[...] + bout_ref[...]).reshape(bt, n, dim).astype(o_ref.dtype)


def _choose_block_batch(B, n, dim, inner, vmem_budget_bytes=24 * 1024 * 1024):
    """How many (b,p) items to process per grid step.

    Targets >= ~512 MXU rows per projection matmul (amortizes per-step overhead)
    while keeping the working set inside a conservative VMEM budget that fits
    the scoped-VMEM defaults of v5e / v6e / v7x.
    """
    per_item = (
        2 * (n * dim * 2)          # x tile, bf16, double-buffered
        + 2 * (n * dim * 2)        # out tile, bf16, double-buffered
        + n * 3 * inner * 2        # qkv scratch, bf16
        + n * dim * 4              # output-projection accumulator, f32
        + 2 * (n * n * 4)          # per-head (n, n) softmax temps, f32 (2x margin)
    )
    fixed = 2 * 2 * (dim * 3 * inner + inner * dim + dim)   # double-buffered bf16 weights
    avail = max(vmem_budget_bytes - fixed, per_item)
    bt = min(B, max(1, pl.cdiv(512, n)), max(1, avail // per_item))
    return int(max(1, bt))


def attention_forward(x, w_qkv, w_out, b_out, *, heads, dim_head, block_batch=None):
    """x: (b, p, n, dim).
    w_qkv: (dim, 3*heads*dim_head)   (transposed nn.Linear weight, bias=False)
    w_out: (heads*dim_head, dim)     (transposed nn.Linear weight)
    b_out: (dim,)                    (to_out Linear bias)
    Returns bf16 output of shape (b, p, n, dim).
    """
    b, p, n, dim = x.shape
    d = dim_head
    inner = heads * d
    scale = float(d) ** (-0.5)
    B = b * p

    bt = block_batch if block_batch is not None else _choose_block_batch(B, n, dim, inner)
    num_blocks = pl.cdiv(B, bt)
    B_pad = num_blocks * bt

    # bf16 MXU operands (f32 accumulation inside the kernel); halves DMA bytes.
    x_flat = x.reshape(B, n, dim).astype(jnp.bfloat16)
    if B_pad != B:
        x_flat = jnp.pad(x_flat, ((0, B_pad - B), (0, 0), (0, 0)))

    # Fold the 1/sqrt(d) scale into the q columns of Wqkv (one-time host-side op).
    w_qkv_scaled = w_qkv.astype(jnp.float32).at[:, :inner].multiply(scale)
    w_qkv_b = w_qkv_scaled.astype(jnp.bfloat16)
    w_out_b = w_out.astype(jnp.bfloat16)
    b_out_2d = b_out.reshape(1, dim).astype(jnp.float32)

    kernel = functools.partial(_fused_attention_kernel,
                               heads=heads, dim_head=dim_head,
                               bt=bt, n=n, dim=dim)

    out = pl.pallas_call(
        kernel,
        out_shape=jax.ShapeDtypeStruct((B_pad, n, dim), jnp.bfloat16),
        grid_spec=pltpu.PrefetchScalarGridSpec(
            num_scalar_prefetch=0,
            grid=(num_blocks,),
            in_specs=[
                pl.BlockSpec((bt, n, dim), lambda i: (i, 0, 0)),
                pl.BlockSpec((dim, 3 * inner), lambda i: (0, 0)),  # grid-invariant
                pl.BlockSpec((inner, dim), lambda i: (0, 0)),      # grid-invariant
                pl.BlockSpec((1, dim), lambda i: (0, 0)),          # grid-invariant
            ],
            out_specs=pl.BlockSpec((bt, n, dim), lambda i: (i, 0, 0)),
            scratch_shapes=[
                pltpu.VMEM((bt * n, 3 * inner), jnp.bfloat16),   # qkv projection
                pltpu.VMEM((bt * n, dim), jnp.float32),          # out-proj accumulator
            ],
        ),
        compiler_params=pltpu.CompilerParams(
            dimension_semantics=("parallel",),
            vmem_limit_bytes=32 * 1024 * 1024,
        ),
    )(x_flat, w_qkv_b, w_out_b, b_out_2d)

    return out[:B].reshape(b, p, n, dim)


def _reference(x, w_qkv, w_out, b_out, *, heads, dim_head):
    """Pure-JAX fp32 reference matching the PyTorch forward."""
    b, p, n, dim = x.shape
    d = dim_head
    inner = heads * d
    qkv = x @ w_qkv
    q, k, v = jnp.split(qkv, 3, axis=-1)

    def to_heads(t):
        return t.reshape(b, p, n, heads, d).transpose(0, 1, 3, 2, 4)

    q, k, v = map(to_heads, (q, k, v))
    dots = jnp.einsum("bphnd,bphmd->bphnm", q, k) * (d ** -0.5)
    attn = jax.nn.softmax(dots, axis=-1)
    out = jnp.einsum("bphnm,bphmd->bphnd", attn, v)
    out = out.transpose(0, 1, 3, 2, 4).reshape(b, p, n, inner)
    return out @ w_out + b_out


if __name__ == "__main__":
    # Small shapes consistent with the module's (b, p, n, dim) forward.
    b, p, n, dim = 2, 2, 8, 32
    heads, dim_head = 4, 16
    inner = heads * dim_head

    key = jax.random.PRNGKey(0)
    kx, kqkv, kout, kb = jax.random.split(key, 4)

    x = jax.random.normal(kx, (b, p, n, dim), dtype=jnp.float32)
    # Deterministic synthetic parameters (transposed nn.Linear weights).
    w_qkv = jax.random.normal(kqkv, (dim, 3 * inner), dtype=jnp.float32) * (dim ** -0.5)
    w_out = jax.random.normal(kout, (inner, dim), dtype=jnp.float32) * (inner ** -0.5)
    b_out = jax.random.normal(kb, (dim,), dtype=jnp.float32) * 0.1

    y = attention_forward(x, w_qkv, w_out, b_out, heads=heads, dim_head=dim_head)
    y = jax.block_until_ready(y)

    y_ref = _reference(x, w_qkv, w_out, b_out, heads=heads, dim_head=dim_head)
    assert y.shape == (b, p, n, dim)
    # bf16 MXU operands / bf16 output with f32 accumulation -> bf16-level tolerance.
    y_f32 = y.astype(jnp.float32)
    assert jnp.allclose(y_f32, y_ref, atol=1e-1, rtol=1e-1), (
        "mismatch vs reference, max abs err = %s" % jnp.max(jnp.abs(y_f32 - y_ref)))

    print("KERNEL_OK")
</pallas_src>

<mosaic_0001>
module attributes {stable_mosaic.version = 11 : i64} {
  func.func @_fused_attention_kernel(%arg0: i32, %arg1: memref<4x8x32xbf16, #tpu.memory_space<vmem>>, %arg2: memref<32x192xbf16, #tpu.memory_space<vmem>>, %arg3: memref<64x32xbf16, #tpu.memory_space<vmem>>, %arg4: memref<1x32xf32, #tpu.memory_space<vmem>>, %arg5: memref<4x8x32xbf16, #tpu.memory_space<vmem>>, %arg6: memref<32x192xbf16, #tpu.memory_space<vmem>>, %arg7: memref<32x32xf32, #tpu.memory_space<vmem>>) attributes {dimension_semantics = [#tpu.dimension_semantics<parallel>], iteration_bounds = array<i64: 1>, scalar_prefetch = 0 : i64, scratch_operands = 2 : i64, tpu.core_type = #tpu.core_type<tc>, window_params = [{transform_indices = @transform_0, window_bounds = array<i64: 4, 8, 32>}, {pipeline_mode = #tpu.pipeline_mode<synchronous>, transform_indices = @transform_1, window_bounds = array<i64: 32, 192>}, {pipeline_mode = #tpu.pipeline_mode<synchronous>, transform_indices = @transform_2, window_bounds = array<i64: 64, 32>}, {pipeline_mode = #tpu.pipeline_mode<synchronous>, transform_indices = @transform_3, window_bounds = array<i64: 1, 32>}, {transform_indices = @transform_4, window_bounds = array<i64: 4, 8, 32>}]} {
    %c0 = arith.constant 0 : index
    %c0_0 = arith.constant 0 : index
    %c0_1 = arith.constant 0 : index
    %0 = vector.load %arg1[%c0, %c0_0, %c0_1] : memref<4x8x32xbf16, #tpu.memory_space<vmem>>, vector<4x8x32xbf16>
    %1 = vector.shape_cast %0 : vector<4x8x32xbf16> to vector<32x32xbf16>
    %c0_2 = arith.constant 0 : index
    %c0_3 = arith.constant 0 : index
    %2 = vector.load %arg2[%c0_2, %c0_3] : memref<32x192xbf16, #tpu.memory_space<vmem>>, vector<32x192xbf16>
    %cst = arith.constant dense<0.000000e+00> : vector<32x192xf32>
    %3 = tpu.matmul %1, %2, %cst {dimension_numbers = #tpu.dot_dimension_numbers<[1], [0], [0], [1], [0, 0, 1, 1], [], []>} : vector<32x32xbf16>, vector<32x192xbf16>, vector<32x192xf32> -> vector<32x192xf32>
    %4 = arith.truncf %3 : vector<32x192xf32> to vector<32x192xbf16>
    %c0_4 = arith.constant 0 : index
    %c0_5 = arith.constant 0 : index
    %5 = vector.load %arg6[%c0_4, %c0_5] : memref<32x192xbf16, #tpu.memory_space<vmem>>, vector<32x192xbf16>
    tpu.vector_store %arg6[%c0_4, %c0_5], %4 {strides = array<i32>} : memref<32x192xbf16, #tpu.memory_space<vmem>>, vector<32x192xbf16>,
    %c0_6 = arith.constant 0 : index
    %c0_7 = arith.constant 0 : index
    %6 = vector.load %arg6[%c0_6, %c0_7] : memref<32x192xbf16, #tpu.memory_space<vmem>>, vector<32x16xbf16>
    %7 = vector.shape_cast %6 : vector<32x16xbf16> to vector<4x8x16xbf16>
    %c0_8 = arith.constant 0 : index
    %c64 = arith.constant 64 : index
    %8 = vector.load %arg6[%c0_8, %c64] : memref<32x192xbf16, #tpu.memory_space<vmem>>, vector<32x16xbf16>
    %9 = vector.shape_cast %8 : vector<32x16xbf16> to vector<4x8x16xbf16>
    %c0_9 = arith.constant 0 : index
    %c128 = arith.constant 128 : index
    %10 = vector.load %arg6[%c0_9, %c128] : memref<32x192xbf16, #tpu.memory_space<vmem>>, vector<32x16xbf16>
    %11 = vector.shape_cast %10 : vector<32x16xbf16> to vector<4x8x16xbf16>
    "tpu.trace_start"() <{level = 10 : i32, message = "bqd,bkd->bqk"}> : () -> ()
    %cst_10 = arith.constant dense<0.000000e+00> : vector<4x8x8xf32>
    %12 = tpu.matmul %7, %9, %cst_10 {dimension_numbers = #tpu.dot_dimension_numbers<[2], [2], [1], [1], [0, 0, 0, 1, 1, 1], [0], [0]>} : vector<4x8x16xbf16>, vector<4x8x16xbf16>, vector<4x8x8xf32> -> vector<4x8x8xf32>
    "tpu.trace_stop"() : () -> ()
    %cst_11 = arith.constant dense<0xFF800000> : vector<4x8xf32>
    %13 = vector.multi_reduction <maximumf>, %12, %cst_11 [2] : vector<4x8x8xf32> to vector<4x8xf32>
    %14 = vector.shape_cast %13 : vector<4x8xf32> to vector<4x8x1xf32>
    %15 = vector.broadcast %14 : vector<4x8x1xf32> to vector<4x8x8xf32>
    %16 = arith.subf %12, %15 : vector<4x8x8xf32>
    %17 = math.exp %16 : vector<4x8x8xf32>
    %cst_12 = arith.constant dense<0.000000e+00> : vector<4x8xf32>
    %18 = vector.multi_reduction <add>, %17, %cst_12 [2] : vector<4x8x8xf32> to vector<4x8xf32>
    %19 = vector.shape_cast %18 : vector<4x8xf32> to vector<4x8x1xf32>
    %20 = arith.truncf %17 : vector<4x8x8xf32> to vector<4x8x8xbf16>
    "tpu.trace_start"() <{level = 10 : i32, message = "bqk,bkd->bqd"}> : () -> ()
    %cst_13 = arith.constant dense<0.000000e+00> : vector<4x8x16xf32>
    %21 = tpu.matmul %20, %11, %cst_13 {dimension_numbers = #tpu.dot_dimension_numbers<[2], [1], [1], [2], [0, 0, 0, 1, 1, 2], [0], [0]>} : vector<4x8x8xbf16>, vector<4x8x16xbf16>, vector<4x8x16xf32> -> vector<4x8x16xf32>
    "tpu.trace_stop"() : () -> ()
    %22 = tpu.reciprocal %19 {approx = true} : vector<4x8x1xf32> -> vector<4x8x1xf32>
    %23 = vector.broadcast %22 : vector<4x8x1xf32> to vector<4x8x16xf32>
    %24 = arith.mulf %21, %23 : vector<4x8x16xf32>
    %25 = vector.shape_cast %24 : vector<4x8x16xf32> to vector<32x16xf32>
    %26 = arith.truncf %25 : vector<32x16xf32> to vector<32x16xbf16>
    %c0_14 = arith.constant 0 : index
    %c0_15 = arith.constant 0 : index
    %27 = vector.load %arg3[%c0_14, %c0_15] : memref<64x32xbf16, #tpu.memory_space<vmem>>, vector<16x32xbf16>
    %cst_16 = arith.constant dense<0.000000e+00> : vector<32x32xf32>
    %28 = tpu.matmul %26, %27, %cst_16 {dimension_numbers = #tpu.dot_dimension_numbers<[1], [0], [0], [1], [0, 0, 1, 1], [], []>} : vector<32x16xbf16>, vector<16x32xbf16>, vector<32x32xf32> -> vector<32x32xf32>
    %c0_17 = arith.constant 0 : index
    %c0_18 = arith.constant 0 : index
    %29 = vector.load %arg7[%c0_17, %c0_18] : memref<32x32xf32, #tpu.memory_space<vmem>>, vector<32x32xf32>
    tpu.vector_store %arg7[%c0_17, %c0_18], %28 {strides = array<i32>} : memref<32x32xf32, #tpu.memory_space<vmem>>, vector<32x32xf32>,
    %c0_19 = arith.constant 0 : index
    %c16 = arith.constant 16 : index
    %30 = vector.load %arg6[%c0_19, %c16] : memref<32x192xbf16, #tpu.memory_space<vmem>>, vector<32x16xbf16>
    %31 = vector.shape_cast %30 : vector<32x16xbf16> to vector<4x8x16xbf16>
    %c0_20 = arith.constant 0 : index
    %c80 = arith.constant 80 : index
    %32 = vector.load %arg6[%c0_20, %c80] : memref<32x192xbf16, #tpu.memory_space<vmem>>, vector<32x16xbf16>
    %33 = vector.shape_cast %32 : vector<32x16xbf16> to vector<4x8x16xbf16>
    %c0_21 = arith.constant 0 : index
    %c144 = arith.constant 144 : index
    %34 = vector.load %arg6[%c0_21, %c144] : memref<32x192xbf16, #tpu.memory_space<vmem>>, vector<32x16xbf16>
    %35 = vector.shape_cast %34 : vector<32x16xbf16> to vector<4x8x16xbf16>
    "tpu.trace_start"() <{level = 10 : i32, message = "bqd,bkd->bqk"}> : () -> ()
    %cst_22 = arith.constant dense<0.000000e+00> : vector<4x8x8xf32>
    %36 = tpu.matmul %31, %33, %cst_22 {dimension_numbers = #tpu.dot_dimension_numbers<[2], [2], [1], [1], [0, 0, 0, 1, 1, 1], [0], [0]>} : vector<4x8x16xbf16>, vector<4x8x16xbf16>, vector<4x8x8xf32> -> vector<4x8x8xf32>
    "tpu.trace_stop"() : () -> ()
    %cst_23 = arith.constant dense<0xFF800000> : vector<4x8xf32>
    %37 = vector.multi_reduction <maximumf>, %36, %cst_23 [2] : vector<4x8x8xf32> to vector<4x8xf32>
    %38 = vector.shape_cast %37 : vector<4x8xf32> to vector<4x8x1xf32>
    %39 = vector.broadcast %38 : vector<4x8x1xf32> to vector<4x8x8xf32>
    %40 = arith.subf %36, %39 : vector<4x8x8xf32>
    %41 = math.exp %40 : vector<4x8x8xf32>
    %cst_24 = arith.constant dense<0.000000e+00> : vector<4x8xf32>
    %42 = vector.multi_reduction <add>, %41, %cst_24 [2] : vector<4x8x8xf32> to vector<4x8xf32>
    %43 = vector.shape_cast %42 : vector<4x8xf32> to vector<4x8x1xf32>
    %44 = arith.truncf %41 : vector<4x8x8xf32> to vector<4x8x8xbf16>
    "tpu.trace_start"() <{level = 10 : i32, message = "bqk,bkd->bqd"}> : () -> ()
    %cst_25 = arith.constant dense<0.000000e+00> : vector<4x8x16xf32>
    %45 = tpu.matmul %44, %35, %cst_25 {dimension_numbers = #tpu.dot_dimension_numbers<[2], [1], [1], [2], [0, 0, 0, 1, 1, 2], [0], [0]>} : vector<4x8x8xbf16>, vector<4x8x16xbf16>, vector<4x8x16xf32> -> vector<4x8x16xf32>
    "tpu.trace_stop"() : () -> ()
    %46 = tpu.reciprocal %43 {approx = true} : vector<4x8x1xf32> -> vector<4x8x1xf32>
    %47 = vector.broadcast %46 : vector<4x8x1xf32> to vector<4x8x16xf32>
    %48 = arith.mulf %45, %47 : vector<4x8x16xf32>
    %49 = vector.shape_cast %48 : vector<4x8x16xf32> to vector<32x16xf32>
    %50 = arith.truncf %49 : vector<32x16xf32> to vector<32x16xbf16>
    %c16_26 = arith.constant 16 : index
    %c0_27 = arith.constant 0 : index
    %51 = vector.load %arg3[%c16_26, %c0_27] : memref<64x32xbf16, #tpu.memory_space<vmem>>, vector<16x32xbf16>
    %cst_28 = arith.constant dense<0.000000e+00> : vector<32x32xf32>
    %52 = tpu.matmul %50, %51, %cst_28 {dimension_numbers = #tpu.dot_dimension_numbers<[1], [0], [0], [1], [0, 0, 1, 1], [], []>} : vector<32x16xbf16>, vector<16x32xbf16>, vector<32x32xf32> -> vector<32x32xf32>
    %c0_29 = arith.constant 0 : index
    %c0_30 = arith.constant 0 : index
    %53 = vector.load %arg7[%c0_29, %c0_30] : memref<32x32xf32, #tpu.memory_space<vmem>>, vector<32x32xf32>
    %54 = arith.addf %53, %52 : vector<32x32xf32>
    %c0_31 = arith.constant 0 : index
    %c0_32 = arith.constant 0 : index
    %55 = vector.load %arg7[%c0_31, %c0_32] : memref<32x32xf32, #tpu.memory_space<vmem>>, vector<32x32xf32>
    tpu.vector_store %arg7[%c0_31, %c0_32], %54 {strides = array<i32>} : memref<32x32xf32, #tpu.memory_space<vmem>>, vector<32x32xf32>,
    %c0_33 = arith.constant 0 : index
    %c32 = arith.constant 32 : index
    %56 = vector.load %arg6[%c0_33, %c32] : memref<32x192xbf16, #tpu.memory_space<vmem>>, vector<32x16xbf16>
    %57 = vector.shape_cast %56 : vector<32x16xbf16> to vector<4x8x16xbf16>
    %c0_34 = arith.constant 0 : index
    %c96 = arith.constant 96 : index
    %58 = vector.load %arg6[%c0_34, %c96] : memref<32x192xbf16, #tpu.memory_space<vmem>>, vector<32x16xbf16>
    %59 = vector.shape_cast %58 : vector<32x16xbf16> to vector<4x8x16xbf16>
    %c0_35 = arith.constant 0 : index
    %c160 = arith.constant 160 : index
    %60 = vector.load %arg6[%c0_35, %c160] : memref<32x192xbf16, #tpu.memory_space<vmem>>, vector<32x16xbf16>
    %61 = vector.shape_cast %60 : vector<32x16xbf16> to vector<4x8x16xbf16>
    "tpu.trace_start"() <{level = 10 : i32, message = "bqd,bkd->bqk"}> : () -> ()
    %cst_36 = arith.constant dense<0.000000e+00> : vector<4x8x8xf32>
    %62 = tpu.matmul %57, %59, %cst_36 {dimension_numbers = #tpu.dot_dimension_numbers<[2], [2], [1], [1], [0, 0, 0, 1, 1, 1], [0], [0]>} : vector<4x8x16xbf16>, vector<4x8x16xbf16>, vector<4x8x8xf32> -> vector<4x8x8xf32>
    "tpu.trace_stop"() : () -> ()
    %cst_37 = arith.constant dense<0xFF800000> : vector<4x8xf32>
    %63 = vector.multi_reduction <maximumf>, %62, %cst_37 [2] : vector<4x8x8xf32> to vector<4x8xf32>
    %64 = vector.shape_cast %63 : vector<4x8xf32> to vector<4x8x1xf32>
    %65 = vector.broadcast %64 : vector<4x8x1xf32> to vector<4x8x8xf32>
    %66 = arith.subf %62, %65 : vector<4x8x8xf32>
    %67 = math.exp %66 : vector<4x8x8xf32>
    %cst_38 = arith.constant dense<0.000000e+00> : vector<4x8xf32>
    %68 = vector.multi_reduction <add>, %67, %cst_38 [2] : vector<4x8x8xf32> to vector<4x8xf32>
    %69 = vector.shape_cast %68 : vector<4x8xf32> to vector<4x8x1xf32>
    %70 = arith.truncf %67 : vector<4x8x8xf32> to vector<4x8x8xbf16>
    "tpu.trace_start"() <{level = 10 : i32, message = "bqk,bkd->bqd"}> : () -> ()
    %cst_39 = arith.constant dense<0.000000e+00> : vector<4x8x16xf32>
    %71 = tpu.matmul %70, %61, %cst_39 {dimension_numbers = #tpu.dot_dimension_numbers<[2], [1], [1], [2], [0, 0, 0, 1, 1, 2], [0], [0]>} : vector<4x8x8xbf16>, vector<4x8x16xbf16>, vector<4x8x16xf32> -> vector<4x8x16xf32>
    "tpu.trace_stop"() : () -> ()
    %72 = tpu.reciprocal %69 {approx = true} : vector<4x8x1xf32> -> vector<4x8x1xf32>
    %73 = vector.broadcast %72 : vector<4x8x1xf32> to vector<4x8x16xf32>
    %74 = arith.mulf %71, %73 : vector<4x8x16xf32>
    %75 = vector.shape_cast %74 : vector<4x8x16xf32> to vector<32x16xf32>
    %76 = arith.truncf %75 : vector<32x16xf32> to vector<32x16xbf16>
    %c32_40 = arith.constant 32 : index
    %c0_41 = arith.constant 0 : index
    %77 = vector.load %arg3[%c32_40, %c0_41] : memref<64x32xbf16, #tpu.memory_space<vmem>>, vector<16x32xbf16>
    %cst_42 = arith.constant dense<0.000000e+00> : vector<32x32xf32>
    %78 = tpu.matmul %76, %77, %cst_42 {dimension_numbers = #tpu.dot_dimension_numbers<[1], [0], [0], [1], [0, 0, 1, 1], [], []>} : vector<32x16xbf16>, vector<16x32xbf16>, vector<32x32xf32> -> vector<32x32xf32>
    %c0_43 = arith.constant 0 : index
    %c0_44 = arith.constant 0 : index
    %79 = vector.load %arg7[%c0_43, %c0_44] : memref<32x32xf32, #tpu.memory_space<vmem>>, vector<32x32xf32>
    %80 = arith.addf %79, %78 : vector<32x32xf32>
    %c0_45 = arith.constant 0 : index
    %c0_46 = arith.constant 0 : index
    %81 = vector.load %arg7[%c0_45, %c0_46] : memref<32x32xf32, #tpu.memory_space<vmem>>, vector<32x32xf32>
    tpu.vector_store %arg7[%c0_45, %c0_46], %80 {strides = array<i32>} : memref<32x32xf32, #tpu.memory_space<vmem>>, vector<32x32xf32>,
    %c0_47 = arith.constant 0 : index
    %c48 = arith.constant 48 : index
    %82 = vector.load %arg6[%c0_47, %c48] : memref<32x192xbf16, #tpu.memory_space<vmem>>, vector<32x16xbf16>
    %83 = vector.shape_cast %82 : vector<32x16xbf16> to vector<4x8x16xbf16>
    %c0_48 = arith.constant 0 : index
    %c112 = arith.constant 112 : index
    %84 = vector.load %arg6[%c0_48, %c112] : memref<32x192xbf16, #tpu.memory_space<vmem>>, vector<32x16xbf16>
    %85 = vector.shape_cast %84 : vector<32x16xbf16> to vector<4x8x16xbf16>
    %c0_49 = arith.constant 0 : index
    %c176 = arith.constant 176 : index
    %86 = vector.load %arg6[%c0_49, %c176] : memref<32x192xbf16, #tpu.memory_space<vmem>>, vector<32x16xbf16>
    %87 = vector.shape_cast %86 : vector<32x16xbf16> to vector<4x8x16xbf16>
    "tpu.trace_start"() <{level = 10 : i32, message = "bqd,bkd->bqk"}> : () -> ()
    %cst_50 = arith.constant dense<0.000000e+00> : vector<4x8x8xf32>
    %88 = tpu.matmul %83, %85, %cst_50 {dimension_numbers = #tpu.dot_dimension_numbers<[2], [2], [1], [1], [0, 0, 0, 1, 1, 1], [0], [0]>} : vector<4x8x16xbf16>, vector<4x8x16xbf16>, vector<4x8x8xf32> -> vector<4x8x8xf32>
    "tpu.trace_stop"() : () -> ()
    %cst_51 = arith.constant dense<0xFF800000> : vector<4x8xf32>
    %89 = vector.multi_reduction <maximumf>, %88, %cst_51 [2] : vector<4x8x8xf32> to vector<4x8xf32>
    %90 = vector.shape_cast %89 : vector<4x8xf32> to vector<4x8x1xf32>
    %91 = vector.broadcast %90 : vector<4x8x1xf32> to vector<4x8x8xf32>
    %92 = arith.subf %88, %91 : vector<4x8x8xf32>
    %93 = math.exp %92 : vector<4x8x8xf32>
    %cst_52 = arith.constant dense<0.000000e+00> : vector<4x8xf32>
    %94 = vector.multi_reduction <add>, %93, %cst_52 [2] : vector<4x8x8xf32> to vector<4x8xf32>
    %95 = vector.shape_cast %94 : vector<4x8xf32> to vector<4x8x1xf32>
    %96 = arith.truncf %93 : vector<4x8x8xf32> to vector<4x8x8xbf16>
    "tpu.trace_start"() <{level = 10 : i32, message = "bqk,bkd->bqd"}> : () -> ()
    %cst_53 = arith.constant dense<0.000000e+00> : vector<4x8x16xf32>
    %97 = tpu.matmul %96, %87, %cst_53 {dimension_numbers = #tpu.dot_dimension_numbers<[2], [1], [1], [2], [0, 0, 0, 1, 1, 2], [0], [0]>} : vector<4x8x8xbf16>, vector<4x8x16xbf16>, vector<4x8x16xf32> -> vector<4x8x16xf32>
    "tpu.trace_stop"() : () -> ()
    %98 = tpu.reciprocal %95 {approx = true} : vector<4x8x1xf32> -> vector<4x8x1xf32>
    %99 = vector.broadcast %98 : vector<4x8x1xf32> to vector<4x8x16xf32>
    %100 = arith.mulf %97, %99 : vector<4x8x16xf32>
    %101 = vector.shape_cast %100 : vector<4x8x16xf32> to vector<32x16xf32>
    %102 = arith.truncf %101 : vector<32x16xf32> to vector<32x16xbf16>
    %c48_54 = arith.constant 48 : index
    %c0_55 = arith.constant 0 : index
    %103 = vector.load %arg3[%c48_54, %c0_55] : memref<64x32xbf16, #tpu.memory_space<vmem>>, vector<16x32xbf16>
    %cst_56 = arith.constant dense<0.000000e+00> : vector<32x32xf32>
    %104 = tpu.matmul %102, %103, %cst_56 {dimension_numbers = #tpu.dot_dimension_numbers<[1], [0], [0], [1], [0, 0, 1, 1], [], []>} : vector<32x16xbf16>, vector<16x32xbf16>, vector<32x32xf32> -> vector<32x32xf32>
    %c0_57 = arith.constant 0 : index
    %c0_58 = arith.constant 0 : index
    %105 = vector.load %arg7[%c0_57, %c0_58] : memref<32x32xf32, #tpu.memory_space<vmem>>, vector<32x32xf32>
    %106 = arith.addf %105, %104 : vector<32x32xf32>
    %c0_59 = arith.constant 0 : index
    %c0_60 = arith.constant 0 : index
    %107 = vector.load %arg7[%c0_59, %c0_60] : memref<32x32xf32, #tpu.memory_space<vmem>>, vector<32x32xf32>
    tpu.vector_store %arg7[%c0_59, %c0_60], %106 {strides = array<i32>} : memref<32x32xf32, #tpu.memory_space<vmem>>, vector<32x32xf32>,
    %c0_61 = arith.constant 0 : index
    %c0_62 = arith.constant 0 : index
    %108 = vector.load %arg7[%c0_61, %c0_62] : memref<32x32xf32, #tpu.memory_space<vmem>>, vector<32x32xf32>
    %c0_63 = arith.constant 0 : index
    %c0_64 = arith.constant 0 : index
    %109 = vector.load %arg4[%c0_63, %c0_64] : memref<1x32xf32, #tpu.memory_space<vmem>>, vector<1x32xf32>
    %110 = vector.broadcast %109 : vector<1x32xf32> to vector<32x32xf32>
    %111 = arith.addf %108, %110 : vector<32x32xf32>
    %112 = vector.shape_cast %111 : vector<32x32xf32> to vector<4x8x32xf32>
    %113 = arith.truncf %112 : vector<4x8x32xf32> to vector<4x8x32xbf16>
    %c0_65 = arith.constant 0 : index
    %c0_66 = arith.constant 0 : index
    %c0_67 = arith.constant 0 : index
    %114 = vector.load %arg5[%c0_65, %c0_66, %c0_67] : memref<4x8x32xbf16, #tpu.memory_space<vmem>>, vector<4x8x32xbf16>
    tpu.vector_store %arg5[%c0_65, %c0_66, %c0_67], %113 {strides = array<i32>} : memref<4x8x32xbf16, #tpu.memory_space<vmem>>, vector<4x8x32xbf16>,
    return
  }
  func.func @transform_0(%arg0: i32) -> (i32, i32, i32) {
    %c0_i32 = arith.constant 0 : i32
    %c0_i32_0 = arith.constant 0 : i32
    %c0_i32_1 = arith.constant 0 : i32
    return %arg0, %c0_i32, %c0_i32_0 : i32, i32, i32
  }
  func.func @transform_1(%arg0: i32) -> (i32, i32) {
    %c0_i32 = arith.constant 0 : i32
    %c0_i32_0 = arith.constant 0 : i32
    %c0_i32_1 = arith.constant 0 : i32
    return %c0_i32, %c0_i32_0 : i32, i32
  }
  func.func @transform_2(%arg0: i32) -> (i32, i32) {
    %c0_i32 = arith.constant 0 : i32
    %c0_i32_0 = arith.constant 0 : i32
    %c0_i32_1 = arith.constant 0 : i32
    return %c0_i32, %c0_i32_0 : i32, i32
  }
  func.func @transform_3(%arg0: i32) -> (i32, i32) {
    %c0_i32 = arith.constant 0 : i32
    %c0_i32_0 = arith.constant 0 : i32
    %c0_i32_1 = arith.constant 0 : i32
    return %c0_i32, %c0_i32_0 : i32, i32
  }
  func.func @transform_4(%arg0: i32) -> (i32, i32, i32) {
    %c0_i32 = arith.constant 0 : i32
    %c0_i32_0 = arith.constant 0 : i32
    %c0_i32_1 = arith.constant 0 : i32
    return %arg0, %c0_i32, %c0_i32_0 : i32, i32, i32
  }
}

</mosaic_0001>

<llo_original>
// kernel: tpu_custom_call.1
$region0: #{tpu_custom_call.1}
  #allocation0 [shape = 'u32[]', space=smem, size = 0x4, offset = 0x4, fixed_abs, tag = 'smem constant byte address 0x4 - core index']
  #allocation1 [shape = 'u32[144,128]{1,0:T(1,128)}', space=vmem, size = 0x12000, scoped, tag = 'internal scratch']
  #allocation2 [shape = 'bf16[32,192]{1,0:T(8,128)(2,1)}', space=vmem, size = 0x4000, scoped, tag = 'scratch operand']
  #allocation3 [shape = 'f32[32,32]{1,0:T(8,128)}', space=vmem, size = 0x4000, scoped, tag = 'scratch operand']
  %s0 = inlined_call_operand.vmem [shape: bf16[4,8,32], index: 0, kind: input, shape index: {}]
  %s1 = inlined_call_operand.vmem [shape: bf16[32,192], index: 1, kind: input, shape index: {}]
  %s2 = inlined_call_operand.vmem [shape: bf16[64,32], index: 2, kind: input, shape index: {}]
  %s3 = inlined_call_operand.vmem [shape: f32[1,32], index: 3, kind: input, shape index: {}]
  %s4 = inlined_call_operand.hbm [shape: bf16[4,8,32], index: 4, kind: output, shape index: {}]
  %s5 = sld [smem:[#allocation0]]
  $region26: #{tpu_custom_call.1} parent=0
    _
  %s7 = ssub.s32 1, %s5
  %s8 = scalar_select 0, %s7, %s5
  $region1: #{tpu_custom_call.1} parent=0
    #allocation4 [shape = 'u8[8192]{0}', space=vmem, size = 0x2000, scoped, tag = 'output window, operand 0, single buffered']
    #allocation5 [shape = 's32[1]{0}', space=sflag, size = 0x4, scoped, tag = 'scoped memory for tpu_custom_call.1']
    %9 = vsyncpa [#allocation5], 0
    // Predicated region
    $region2: #{tpu_custom_call.1} parent=1 // pred_check
      _
    $region3: #{tpu_custom_call.1} parent=1 // pred_check_branch
      %11 = sbr.rel (0) target = $region5
    $region4: #{tpu_custom_call.1} parent=1 // pred_region
      _
    $region5: #{tpu_custom_call.1} parent=1 // pred_fallthru
      _
    // Predicated region
    $region6: #{tpu_custom_call.1} parent=1 // pred_check
      _
    $region7: #{tpu_custom_call.1} parent=1 // pred_check_branch
      %13 = sbr.rel (0) target = $region9
    $region8: #{tpu_custom_call.1} parent=1 // pred_region
      _
    $region9: #{tpu_custom_call.1} parent=1 // pred_fallthru
      _
    // Predicated region
    $region10: #{tpu_custom_call.1} parent=1 // pred_check
      _
    $region11: #{tpu_custom_call.1} parent=1 // pred_check_branch
      %15 = sbr.rel (0) target = $region13
    $region12: #{tpu_custom_call.1} parent=1 // pred_region
      _
    $region13: #{tpu_custom_call.1} parent=1 // pred_fallthru
      _
    // Predicated region
    $region14: #{tpu_custom_call.1} parent=1 // pred_check
      _
    $region15: #{tpu_custom_call.1} parent=1 // pred_check_branch
      %17 = sbr.rel (0) target = $region17
    $region16: #{tpu_custom_call.1} parent=1 // pred_region
      _
    $region17: #{tpu_custom_call.1} parent=1 // pred_fallthru
      _
    %v19 = vld [vmem:[%s0] sm:$0xf]
    %v20 = vld [vmem:[%s0 + $0x4] sm:$0xf]
    %v21 = vld [vmem:[%s0 + $0x8] sm:$0xf]
    %v22 = vld [vmem:[%s0 + $0xc] sm:$0xf]
    %v23 = vld [vmem:[%s1] sm:$0xff]
    %v24 = vld [vmem:[%s1 + $0x8] sm:$0xff]
    %v25 = vld [vmem:[%s1 + $0x10] sm:$0xff]
    %v26 = vld [vmem:[%s1 + $0x18] sm:$0xff]
    %v31 = vunpack.c.l.b16 %v19
    %v32 = vunpack.c.l.b16 %v20
    %v33 = vunpack.c.l.b16 %v21
    %v34 = vunpack.c.l.b16 %v22
    %v35 = vpack.c.b16 %v32, %v31
    %v36 = vpack.c.b16 %v34, %v33
    %v41 = vunpack.c.l.b16 %v23
    %v42 = vunpack.c.h.b16 %v23
    %v43 = vunpack.c.l.b16 %v24
    %v44 = vunpack.c.h.b16 %v24
    %v45 = vunpack.c.l.b16 %v25
    %v46 = vunpack.c.h.b16 %v25
    %v47 = vunpack.c.l.b16 %v26
    %v48 = vunpack.c.h.b16 %v26
    %v49 = vpack.c.b16 %v43, %v41
    %v50 = vpack.c.b16 %v44, %v42
    %v51 = vpack.c.b16 %v47, %v45
    %v52 = vpack.c.b16 %v48, %v46
    %vm57 = vcmask 261120
    %v59 = vsel %vm57, %v35, 0
    %v62 = vsel %vm57, %v36, 0
    %64 = vmatprep.subr.bf16.mxu0 0
    %65 = vmatpush1.bf16.msra.mxu0 0
    %66 = vmatprep.subr.bf16.mxu0 0
    %67 = vmatpush1.bf16.msra.mxu0 0
    %68 = vmatprep.subr.bf16.mxu0 0
    %69 = vmatpush1.bf16.msra.mxu0 0
    %70 = vmatprep.subr.bf16.mxu0 0
    %71 = vmatpush1.bf16.msra.mxu0 0
    %72 = vmatprep.subr.bf16.mxu0 0
    %73 = vmatpush1.bf16.msra.mxu0 0
    %74 = vmatprep.subr.bf16.mxu0 0
    %75 = vmatpush1.bf16.msra.mxu0 0
    %76 = vmatprep.subr.bf16.mxu0 %v52
    %77 = vmatpush1.bf16.msra.mxu0 %v51
    %78 = vmatprep.subr.bf16.mxu0 %v50
    %79 = vmatpush1.bf16.msra.mxu0 %v49
    %80 = vmatprep.subr.bf16.mxu0 0
    %81 = vmatpush2.bf16.msra.mxu0 0
    %82 = vmatprep.subr.bf16.mxu0 0
    %83 = vmatpush2.bf16.msra.mxu0 0
    %84 = vmatprep.subr.bf16.mxu0 0
    %85 = vmatpush2.bf16.msra.mxu0 0
    %86 = vmatprep.subr.bf16.mxu0 0
    %87 = vmatpush2.bf16.msra.mxu0 0
    %88 = vmatprep.subr.bf16.mxu0 0
    %89 = vmatpush2.bf16.msra.mxu0 0
    %90 = vmatprep.subr.bf16.mxu0 0
    %91 = vmatpush2.bf16.msra.mxu0 0
    %92 = vmatprep.subr.bf16.mxu0 0
    %93 = vmatpush2.bf16.msra.mxu0 0
    %94 = vmatprep.subr.bf16.mxu0 0
    %95 = vmatpush2.bf16.msra.mxu0 0
    %96 = vmatprep.mubr.bf16.mxu0 0
    %97 = vmatmul.mubr.bf16.gmra.mxu0 %v59
    %v98 = vpop.f32.mrf.mxu0
    %v99 = vadd.f32 0.0, %v98
    %v100 = vpop.f32.mrf.mxu0
    %v101 = vadd.f32 0.0, %v100
    %v102 = vpop.f32.mrf.mxu0
    %v103 = vadd.f32 0.0, %v102
    %v104 = vpop.f32.mrf.mxu0
    %v105 = vadd.f32 0.0, %v104
    %106 = vmatprep.mubr.bf16.mxu0 0
    %107 = vmatmul.mubr.bf16.gmra.mxu0 %v62
    %v108 = vpop.f32.mrf.mxu0
    %v109 = vadd.f32 0.0, %v108
    %v110 = vpop.f32.mrf.mxu0
    %v111 = vadd.f32 0.0, %v110
    %v112 = vpop.f32.mrf.mxu0
    %v113 = vadd.f32 0.0, %v112
    %v114 = vpop.f32.mrf.mxu0
    %v115 = vadd.f32 0.0, %v114
    %116 = vdwg.mxu0
    %v117 = vpack.c.bf16 %v103, %v99
    %v118 = vpack.c.bf16 %v105, %v101
    %v119 = vpack.c.bf16 %v113, %v109
    %v120 = vpack.c.bf16 %v115, %v111
    %v125 = vunpack.c.l.b16 %v117
    %v126 = vunpack.c.l.b16 %v118
    %v127 = vunpack.c.h.b16 %v117
    %v128 = vunpack.c.h.b16 %v118
    %v129 = vunpack.c.l.b16 %v119
    %v130 = vunpack.c.l.b16 %v120
    %v131 = vunpack.c.h.b16 %v119
    %v132 = vunpack.c.h.b16 %v120
    %v133 = vpack.c.b16 %v126, %v125
    %v134 = vpack.c.b16 %v128, %v127
    %v135 = vpack.c.b16 %v130, %v129
    %v136 = vpack.c.b16 %v132, %v131
    %vm141 = vcmask 1043456
    %vm142 = vcmask 523268
    %vm143 = vmor %vm142, %vm141
    %144 = vst.msk [vmem:[#allocation2] sm:$0xff] %vm143, %v133
    %145 = vst.msk [vmem:[#allocation2 + $0x8] sm:$0xff] %vm143, %v134
    %146 = vst.msk [vmem:[#allocation2 + $0x10] sm:$0xff] %vm143, %v135
    %147 = vst.msk [vmem:[#allocation2 + $0x18] sm:$0xff] %vm143, %v136
    %v148 = vld [vmem:[#allocation2] sm:$0xf]
    %v149 = vld [vmem:[#allocation2 + $0x8] sm:$0xf]
    %v150 = vld [vmem:[#allocation2 + $0x10] sm:$0xf]
    %v151 = vld [vmem:[#allocation2 + $0x18] sm:$0xf]
    %v152 = vld [vmem:[#allocation2 + $0x4] sm:$0xf]
    %v153 = vld [vmem:[#allocation2 + $0xc] sm:$0xf]
    %v154 = vld [vmem:[#allocation2 + $0x14] sm:$0xf]
    %v155 = vld [vmem:[#allocation2 + $0x1c] sm:$0xf]
    %v157 = vunpack.c.l.b16 %v148
    %v158 = vpack.c.b16 %v157, %v157
    %159 = vrot.lane.b32.xlu0 %v158, 64
    %v160 = vpop.permute.xlu0 %159
    %vm161 = vcmask 130048
    %v163 = vsel %vm161, %v148, 0
    %v166 = vsel %vm161, %v160, 0
    %168 = vmatprep.subr.bf16.mxu0 0
    %169 = vmatpush1.bf16.xpose.msra.mxu0 0
    %170 = vmatprep.subr.bf16.mxu0 0
    %171 = vmatpush1.bf16.xpose.msra.mxu0 0
    %172 = vmatprep.subr.bf16.mxu0 0
    %173 = vmatpush1.bf16.xpose.msra.mxu0 0
    %174 = vmatprep.subr.bf16.mxu0 0
    %175 = vmatpush1.bf16.xpose.msra.mxu0 0
    %176 = vmatprep.subr.bf16.mxu0 0
    %177 = vmatpush1.bf16.xpose.msra.mxu0 0
    %178 = vmatprep.subr.bf16.mxu0 0
    %179 = vmatpush1.bf16.xpose.msra.mxu0 0
    %180 = vmatprep.subr.bf16.mxu0 0
    %181 = vmatpush1.bf16.xpose.msra.mxu0 0
    %182 = vmatprep.subr.bf16.mxu0 0
    %183 = vmatpush1.bf16.xpose.msra.mxu0 %v166
    %184 = vmatprep.subr.bf16.mxu0 0
    %185 = vmatpush2.bf16.xpose.msra.mxu0 0
    %186 = vmatprep.subr.bf16.mxu0 0
    %187 = vmatpush2.bf16.xpose.msra.mxu0 0
    %188 = vmatprep.subr.bf16.mxu0 0
    %189 = vmatpush2.bf16.xpose.msra.mxu0 0
    %190 = vmatprep.subr.bf16.mxu0 0
    %191 = vmatpush2.bf16.xpose.msra.mxu0 0
    %192 = vmatprep.subr.bf16.mxu0 0
    %193 = vmatpush2.bf16.xpose.msra.mxu0 0
    %194 = vmatprep.subr.bf16.mxu0 0
    %195 = vmatpush2.bf16.xpose.msra.mxu0 0
    %196 = vmatprep.subr.bf16.mxu0 0
    %197 = vmatpush2.bf16.xpose.msra.mxu0 0
    %198 = vmatprep.subr.bf16.mxu0 0
    %199 = vmatpush2.bf16.xpose.msra.mxu0 0
    %200 = vmatprep.mubr.bf16.mxu0 0
    %201 = vmatmul.mubr.bf16.gmra.mxu0 %v163
    %v202 = vpop.f32.mrf.mxu0
    %v203 = vadd.f32 0.0, %v202
    %v204 = vpop.f32.mrf.mxu0
    %v205 = vpop.f32.mrf.mxu0
    %v206 = vpop.f32.mrf.mxu0
    %207 = vdwg.mxu0
    %v209 = vunpack.c.l.b16 %v149
    %v210 = vpack.c.b16 %v209, %v209
    %211 = vrot.lane.b32.xlu0 %v210, 64
    %v212 = vpop.permute.xlu0 %211
    %v214 = vsel %vm161, %v149, 0
    %v217 = vsel %vm161, %v212, 0
    %219 = vmatprep.subr.bf16.mxu0 0
    %220 = vmatpush1.bf16.xpose.msra.mxu0 0
    %221 = vmatprep.subr.bf16.mxu0 0
    %222 = vmatpush1.bf16.xpose.msra.mxu0 0
    %223 = vmatprep.subr.bf16.mxu0 0
    %224 = vmatpush1.bf16.xpose.msra.mxu0 0
    %225 = vmatprep.subr.bf16.mxu0 0
    %226 = vmatpush1.bf16.xpose.msra.mxu0 0
    %227 = vmatprep.subr.bf16.mxu0 0
    %228 = vmatpush1.bf16.xpose.msra.mxu0 0
    %229 = vmatprep.subr.bf16.mxu0 0
    %230 = vmatpush1.bf16.xpose.msra.mxu0 0
    %231 = vmatprep.subr.bf16.mxu0 0
    %232 = vmatpush1.bf16.xpose.msra.mxu0 0
    %233 = vmatprep.subr.bf16.mxu0 0
    %234 = vmatpush1.bf16.xpose.msra.mxu0 %v217
    %235 = vmatprep.subr.bf16.mxu0 0
    %236 = vmatpush2.bf16.xpose.msra.mxu0 0
    %237 = vmatprep.subr.bf16.mxu0 0
    %238 = vmatpush2.bf16.xpose.msra.mxu0 0
    %239 = vmatprep.subr.bf16.mxu0 0
    %240 = vmatpush2.bf16.xpose.msra.mxu0 0
    %241 = vmatprep.subr.bf16.mxu0 0
    %242 = vmatpush2.bf16.xpose.msra.mxu0 0
    %243 = vmatprep.subr.bf16.mxu0 0
    %244 = vmatpush2.bf16.xpose.msra.mxu0 0
    %245 = vmatprep.subr.bf16.mxu0 0
    %246 = vmatpush2.bf16.xpose.msra.mxu0 0
    %247 = vmatprep.subr.bf16.mxu0 0
    %248 = vmatpush2.bf16.xpose.msra.mxu0 0
    %249 = vmatprep.subr.bf16.mxu0 0
    %250 = vmatpush2.bf16.xpose.msra.mxu0 0
    %251 = vmatprep.mubr.bf16.mxu0 0
    %252 = vmatmul.mubr.bf16.gmra.mxu0 %v214
    %v253 = vpop.f32.mrf.mxu0
    %v254 = vadd.f32 0.0, %v253
    %v255 = vpop.f32.mrf.mxu0
    %v256 = vpop.f32.mrf.mxu0
    %v257 = vpop.f32.mrf.mxu0
    %258 = vdwg.mxu0
    %v260 = vunpack.c.l.b16 %v150
    %v261 = vpack.c.b16 %v260, %v260
    %262 = vrot.lane.b32.xlu0 %v261, 64
    %v263 = vpop.permute.xlu0 %262
    %v265 = vsel %vm161, %v150, 0
    %v268 = vsel %vm161, %v263, 0
    %270 = vmatprep.subr.bf16.mxu0 0
    %271 = vmatpush1.bf16.xpose.msra.mxu0 0
    %272 = vmatprep.subr.bf16.mxu0 0
    %273 = vmatpush1.bf16.xpose.msra.mxu0 0
    %274 = vmatprep.subr.bf16.mxu0 0
    %275 = vmatpush1.bf16.xpose.msra.mxu0 0
    %276 = vmatprep.subr.bf16.mxu0 0
    %277 = vmatpush1.bf16.xpose.msra.mxu0 0
    %278 = vmatprep.subr.bf16.mxu0 0
    %279 = vmatpush1.bf16.xpose.msra.mxu0 0
    %280 = vmatprep.subr.bf16.mxu0 0
    %281 = vmatpush1.bf16.xpose.msra.mxu0 0
    %282 = vmatprep.subr.bf16.mxu0 0
    %283 = vmatpush1.bf16.xpose.msra.mxu0 0
    %284 = vmatprep.subr.bf16.mxu0 0
    %285 = vmatpush1.bf16.xpose.msra.mxu0 %v268
    %286 = vmatprep.subr.bf16.mxu0 0
    %287 = vmatpush2.bf16.xpose.msra.mxu0 0
    %288 = vmatprep.subr.bf16.mxu0 0
    %289 = vmatpush2.bf16.xpose.msra.mxu0 0
    %290 = vmatprep.subr.bf16.mxu0 0
    %291 = vmatpush2.bf16.xpose.msra.mxu0 0
    %292 = vmatprep.subr.bf16.mxu0 0
    %293 = vmatpush2.bf16.xpose.msra.mxu0 0
    %294 = vmatprep.subr.bf16.mxu0 0
    %295 = vmatpush2.bf16.xpose.msra.mxu0 0
    %296 = vmatprep.subr.bf16.mxu0 0
    %297 = vmatpush2.bf16.xpose.msra.mxu0 0
    %298 = vmatprep.subr.bf16.mxu0 0
    %299 = vmatpush2.bf16.xpose.msra.mxu0 0
    %300 = vmatprep.subr.bf16.mxu0 0
    %301 = vmatpush2.bf16.xpose.msra.mxu0 0
    %302 = vmatprep.mubr.bf16.mxu0 0
    %303 = vmatmul.mubr.bf16.gmra.mxu0 %v265
    %v304 = vpop.f32.mrf.mxu0
    %v305 = vadd.f32 0.0, %v304
    %v306 = vpop.f32.mrf.mxu0
    %v307 = vpop.f32.mrf.mxu0
    %v308 = vpop.f32.mrf.mxu0
    %309 = vdwg.mxu0
    %v311 = vunpack.c.l.b16 %v151
    %v312 = vpack.c.b16 %v311, %v311
    %313 = vrot.lane.b32.xlu0 %v312, 64
    %v314 = vpop.permute.xlu0 %313
    %v316 = vsel %vm161, %v151, 0
    %v319 = vsel %vm161, %v314, 0
    %321 = vmatprep.subr.bf16.mxu0 0
    %322 = vmatpush1.bf16.xpose.msra.mxu0 0
    %323 = vmatprep.subr.bf16.mxu0 0
    %324 = vmatpush1.bf16.xpose.msra.mxu0 0
    %325 = vmatprep.subr.bf16.mxu0 0
    %326 = vmatpush1.bf16.xpose.msra.mxu0 0
    %327 = vmatprep.subr.bf16.mxu0 0
    %328 = vmatpush1.bf16.xpose.msra.mxu0 0
    %329 = vmatprep.subr.bf16.mxu0 0
    %330 = vmatpush1.bf16.xpose.msra.mxu0 0
    %331 = vmatprep.subr.bf16.mxu0 0
    %332 = vmatpush1.bf16.xpose.msra.mxu0 0
    %333 = vmatprep.subr.bf16.mxu0 0
    %334 = vmatpush1.bf16.xpose.msra.mxu0 0
    %335 = vmatprep.subr.bf16.mxu0 0
    %336 = vmatpush1.bf16.xpose.msra.mxu0 %v319
    %337 = vmatprep.subr.bf16.mxu0 0
    %338 = vmatpush2.bf16.xpose.msra.mxu0 0
    %339 = vmatprep.subr.bf16.mxu0 0
    %340 = vmatpush2.bf16.xpose.msra.mxu0 0
    %341 = vmatprep.subr.bf16.mxu0 0
    %342 = vmatpush2.bf16.xpose.msra.mxu0 0
    %343 = vmatprep.subr.bf16.mxu0 0
    %344 = vmatpush2.bf16.xpose.msra.mxu0 0
    %345 = vmatprep.subr.bf16.mxu0 0
    %346 = vmatpush2.bf16.xpose.msra.mxu0 0
    %347 = vmatprep.subr.bf16.mxu0 0
    %348 = vmatpush2.bf16.xpose.msra.mxu0 0
    %349 = vmatprep.subr.bf16.mxu0 0
    %350 = vmatpush2.bf16.xpose.msra.mxu0 0
    %351 = vmatprep.subr.bf16.mxu0 0
    %352 = vmatpush2.bf16.xpose.msra.mxu0 0
    %353 = vmatprep.mubr.bf16.mxu0 0
    %354 = vmatmul.mubr.bf16.gmra.mxu0 %v316
    %v355 = vpop.f32.mrf.mxu0
    %v356 = vadd.f32 0.0, %v355
    %v357 = vpop.f32.mrf.mxu0
    %v358 = vpop.f32.mrf.mxu0
    %v359 = vpop.f32.mrf.mxu0
    %360 = vdwg.mxu0
    %vm361 = vcmask 64512
    %v362 = vsel %vm361, %v203, -inf
    %363 = vmax.xlane.f32.xlu0 %v362
    %v364 = vpop.xlane.xlu0 %363
    %v365 = vsel %vm361, %v254, -inf
    %366 = vmax.xlane.f32.xlu0 %v365
    %v367 = vpop.xlane.xlu0 %366
    %v368 = vsel %vm361, %v305, -inf
    %369 = vmax.xlane.f32.xlu0 %v368
    %v370 = vpop.xlane.xlu0 %369
    %v371 = vsel %vm361, %v356, -inf
    %372 = vmax.xlane.f32.xlu0 %v371
    %v373 = vpop.xlane.xlu0 %372
    %v374 = vsub.f32 %v203, %v364
    %v375 = vsub.f32 %v254, %v367
    %v376 = vsub.f32 %v305, %v370
    %v377 = vsub.f32 %v356, %v373
    %v378 = vmul.f32 %v374, 1.442695
    %v379 = vpow.pop %v378
    %v380 = vmul.f32 %v375, 1.442695
    %v381 = vpow.pop %v380
    %v382 = vmul.f32 %v376, 1.442695
    %v383 = vpow.pop %v382
    %v384 = vmul.f32 %v377, 1.442695
    %v385 = vpow.pop %v384
    %v386 = vsel %vm361, %v379, 0.0
    %387 = vadd.xlane.f32.xlu0 %v386
    %v388 = vpop.xlane.xlu0 %387
    %v389 = vsel %vm361, %v381, 0.0
    %390 = vadd.xlane.f32.xlu0 %v389
    %v391 = vpop.xlane.xlu0 %390
    %v392 = vsel %vm361, %v383, 0.0
    %393 = vadd.xlane.f32.xlu0 %v392
    %v394 = vpop.xlane.xlu0 %393
    %v395 = vsel %vm361, %v385, 0.0
    %396 = vadd.xlane.f32.xlu0 %v395
    %v397 = vpop.xlane.xlu0 %396
    %v398 = vpack.c.bf16 %v379, %v379
    %v399 = vpack.c.bf16 %v381, %v381
    %v400 = vpack.c.bf16 %v383, %v383
    %v401 = vpack.c.bf16 %v385, %v385
    %v403 = vsel %vm361, %v398, 0
    %v406 = vsel %vm141, %v152, 0
    %408 = vmatprep.subr.bf16.mxu0 0
    %409 = vmatpush1.bf16.msra.mxu0 0
    %410 = vmatprep.subr.bf16.mxu0 0
    %411 = vmatpush1.bf16.msra.mxu0 0
    %412 = vmatprep.subr.bf16.mxu0 0
    %413 = vmatpush1.bf16.msra.mxu0 0
    %414 = vmatprep.subr.bf16.mxu0 0
    %415 = vmatpush1.bf16.msra.mxu0 0
    %416 = vmatprep.subr.bf16.mxu0 0
    %417 = vmatpush1.bf16.msra.mxu0 0
    %418 = vmatprep.subr.bf16.mxu0 0
    %419 = vmatpush1.bf16.msra.mxu0 0
    %420 = vmatprep.subr.bf16.mxu0 0
    %421 = vmatpush1.bf16.msra.mxu0 0
    %422 = vmatprep.subr.bf16.mxu0 0
    %423 = vmatpush1.bf16.msra.mxu0 %v406
    %424 = vmatprep.subr.bf16.mxu0 0
    %425 = vmatpush2.bf16.msra.mxu0 0
    %426 = vmatprep.subr.bf16.mxu0 0
    %427 = vmatpush2.bf16.msra.mxu0 0
    %428 = vmatprep.subr.bf16.mxu0 0
    %429 = vmatpush2.bf16.msra.mxu0 0
    %430 = vmatprep.subr.bf16.mxu0 0
    %431 = vmatpush2.bf16.msra.mxu0 0
    %432 = vmatprep.subr.bf16.mxu0 0
    %433 = vmatpush2.bf16.msra.mxu0 0
    %434 = vmatprep.subr.bf16.mxu0 0
    %435 = vmatpush2.bf16.msra.mxu0 0
    %436 = vmatprep.subr.bf16.mxu0 0
    %437 = vmatpush2.bf16.msra.mxu0 0
    %438 = vmatprep.subr.bf16.mxu0 0
    %439 = vmatpush2.bf16.msra.mxu0 0
    %440 = vmatprep.mubr.bf16.mxu0 0
    %441 = vmatmul.mubr.bf16.gmra.mxu0 %v403
    %v442 = vpop.f32.mrf.mxu0
    %v443 = vadd.f32 0.0, %v442
    %v444 = vpop.f32.mrf.mxu0
    %v445 = vpop.f32.mrf.mxu0
    %v446 = vpop.f32.mrf.mxu0
    %447 = vdwg.mxu0
    %v449 = vsel %vm361, %v399, 0
    %v452 = vsel %vm141, %v153, 0
    %454 = vmatprep.subr.bf16.mxu0 0
    %455 = vmatpush1.bf16.msra.mxu0 0
    %456 = vmatprep.subr.bf16.mxu0 0
    %457 = vmatpush1.bf16.msra.mxu0 0
    %458 = vmatprep.subr.bf16.mxu0 0
    %459 = vmatpush1.bf16.msra.mxu0 0
    %460 = vmatprep.subr.bf16.mxu0 0
    %461 = vmatpush1.bf16.msra.mxu0 0
    %462 = vmatprep.subr.bf16.mxu0 0
    %463 = vmatpush1.bf16.msra.mxu0 0
    %464 = vmatprep.subr.bf16.mxu0 0
    %465 = vmatpush1.bf16.msra.mxu0 0
    %466 = vmatprep.subr.bf16.mxu0 0
    %467 = vmatpush1.bf16.msra.mxu0 0
    %468 = vmatprep.subr.bf16.mxu0 0
    %469 = vmatpush1.bf16.msra.mxu0 %v452
    %470 = vmatprep.subr.bf16.mxu0 0
    %471 = vmatpush2.bf16.msra.mxu0 0
    %472 = vmatprep.subr.bf16.mxu0 0
    %473 = vmatpush2.bf16.msra.mxu0 0
    %474 = vmatprep.subr.bf16.mxu0 0
    %475 = vmatpush2.bf16.msra.mxu0 0
    %476 = vmatprep.subr.bf16.mxu0 0
    %477 = vmatpush2.bf16.msra.mxu0 0
    %478 = vmatprep.subr.bf16.mxu0 0
    %479 = vmatpush2.bf16.msra.mxu0 0
    %480 = vmatprep.subr.bf16.mxu0 0
    %481 = vmatpush2.bf16.msra.mxu0 0
    %482 = vmatprep.subr.bf16.mxu0 0
    %483 = vmatpush2.bf16.msra.mxu0 0
    %484 = vmatprep.subr.bf16.mxu0 0
    %485 = vmatpush2.bf16.msra.mxu0 0
    %486 = vmatprep.mubr.bf16.mxu0 0
    %487 = vmatmul.mubr.bf16.gmra.mxu0 %v449
    %v488 = vpop.f32.mrf.mxu0
    %v489 = vadd.f32 0.0, %v488
    %v490 = vpop.f32.mrf.mxu0
    %v491 = vpop.f32.mrf.mxu0
    %v492 = vpop.f32.mrf.mxu0
    %493 = vdwg.mxu0
    %v495 = vsel %vm361, %v400, 0
    %v498 = vsel %vm141, %v154, 0
    %500 = vmatprep.subr.bf16.mxu0 0
    %501 = vmatpush1.bf16.msra.mxu0 0
    %502 = vmatprep.subr.bf16.mxu0 0
    %503 = vmatpush1.bf16.msra.mxu0 0
    %504 = vmatprep.subr.bf16.mxu0 0
    %505 = vmatpush1.bf16.msra.mxu0 0
    %506 = vmatprep.subr.bf16.mxu0 0
    %507 = vmatpush1.bf16.msra.mxu0 0
    %508 = vmatprep.subr.bf16.mxu0 0
    %509 = vmatpush1.bf16.msra.mxu0 0
    %510 = vmatprep.subr.bf16.mxu0 0
    %511 = vmatpush1.bf16.msra.mxu0 0
    %512 = vmatprep.subr.bf16.mxu0 0
    %513 = vmatpush1.bf16.msra.mxu0 0
    %514 = vmatprep.subr.bf16.mxu0 0
    %515 = vmatpush1.bf16.msra.mxu0 %v498
    %516 = vmatprep.subr.bf16.mxu0 0
    %517 = vmatpush2.bf16.msra.mxu0 0
    %518 = vmatprep.subr.bf16.mxu0 0
    %519 = vmatpush2.bf16.msra.mxu0 0
    %520 = vmatprep.subr.bf16.mxu0 0
    %521 = vmatpush2.bf16.msra.mxu0 0
    %522 = vmatprep.subr.bf16.mxu0 0
    %523 = vmatpush2.bf16.msra.mxu0 0
    %524 = vmatprep.subr.bf16.mxu0 0
    %525 = vmatpush2.bf16.msra.mxu0 0
    %526 = vmatprep.subr.bf16.mxu0 0
    %527 = vmatpush2.bf16.msra.mxu0 0
    %528 = vmatprep.subr.bf16.mxu0 0
    %529 = vmatpush2.bf16.msra.mxu0 0
    %530 = vmatprep.subr.bf16.mxu0 0
    %531 = vmatpush2.bf16.msra.mxu0 0
    %532 = vmatprep.mubr.bf16.mxu0 0
    %533 = vmatmul.mubr.bf16.gmra.mxu0 %v495
    %v534 = vpop.f32.mrf.mxu0
    %v535 = vadd.f32 0.0, %v534
    %v536 = vpop.f32.mrf.mxu0
    %v537 = vpop.f32.mrf.mxu0
    %v538 = vpop.f32.mrf.mxu0
    %539 = vdwg.mxu0
    %v541 = vsel %vm361, %v401, 0
    %v544 = vsel %vm141, %v155, 0
    %546 = vmatprep.subr.bf16.mxu0 0
    %547 = vmatpush1.bf16.msra.mxu0 0
    %548 = vmatprep.subr.bf16.mxu0 0
    %549 = vmatpush1.bf16.msra.mxu0 0
    %550 = vmatprep.subr.bf16.mxu0 0
    %551 = vmatpush1.bf16.msra.mxu0 0
    %552 = vmatprep.subr.bf16.mxu0 0
    %553 = vmatpush1.bf16.msra.mxu0 0
    %554 = vmatprep.subr.bf16.mxu0 0
    %555 = vmatpush1.bf16.msra.mxu0 0
    %556 = vmatprep.subr.bf16.mxu0 0
    %557 = vmatpush1.bf16.msra.mxu0 0
    %558 = vmatprep.subr.bf16.mxu0 0
    %559 = vmatpush1.bf16.msra.mxu0 0
    %560 = vmatprep.subr.bf16.mxu0 0
    %561 = vmatpush1.bf16.msra.mxu0 %v544
    %562 = vmatprep.subr.bf16.mxu0 0
    %563 = vmatpush2.bf16.msra.mxu0 0
    %564 = vmatprep.subr.bf16.mxu0 0
    %565 = vmatpush2.bf16.msra.mxu0 0
    %566 = vmatprep.subr.bf16.mxu0 0
    %567 = vmatpush2.bf16.msra.mxu0 0
    %568 = vmatprep.subr.bf16.mxu0 0
    %569 = vmatpush2.bf16.msra.mxu0 0
    %570 = vmatprep.subr.bf16.mxu0 0
    %571 = vmatpush2.bf16.msra.mxu0 0
    %572 = vmatprep.subr.bf16.mxu0 0
    %573 = vmatpush2.bf16.msra.mxu0 0
    %574 = vmatprep.subr.bf16.mxu0 0
    %575 = vmatpush2.bf16.msra.mxu0 0
    %576 = vmatprep.subr.bf16.mxu0 0
    %577 = vmatpush2.bf16.msra.mxu0 0
    %578 = vmatprep.mubr.bf16.mxu0 0
    %579 = vmatmul.mubr.bf16.gmra.mxu0 %v541
    %v580 = vpop.f32.mrf.mxu0
    %v581 = vadd.f32 0.0, %v580
    %v582 = vpop.f32.mrf.mxu0
    %v583 = vpop.f32.mrf.mxu0
    %v584 = vpop.f32.mrf.mxu0
    %585 = vdwg.mxu0
    %v586 = vrcp.pop %v388
    %v587 = vrcp.pop %v391
    %v588 = vrcp.pop %v394
    %v589 = vrcp.pop %v397
    %v590 = vmul.f32 %v443, %v586
    %v591 = vmul.f32 %v489, %v587
    %v592 = vmul.f32 %v535, %v588
    %v593 = vmul.f32 %v581, %v589
    %v594 = vpack.c.bf16 %v591, %v590
    %v595 = vpack.c.bf16 %v593, %v592
    %v596 = vld [vmem:[%s2] sm:$0xf]
    %v597 = vld [vmem:[%s2 + $0x4] sm:$0xf]
    %v600 = vunpack.c.l.b16 %v596
    %v601 = vunpack.c.l.b16 %v597
    %v602 = vpack.c.b16 %v601, %v600
    %v605 = vsel %vm161, %v594, 0
    %v608 = vsel %vm161, %v595, 0
    %610 = vmatprep.subr.bf16.mxu0 0
    %611 = vmatpush1.bf16.msra.mxu0 0
    %612 = vmatprep.subr.bf16.mxu0 0
    %613 = vmatpush1.bf16.msra.mxu0 0
    %614 = vmatprep.subr.bf16.mxu0 0
    %615 = vmatpush1.bf16.msra.mxu0 0
    %616 = vmatprep.subr.bf16.mxu0 0
    %617 = vmatpush1.bf16.msra.mxu0 0
    %618 = vmatprep.subr.bf16.mxu0 0
    %619 = vmatpush1.bf16.msra.mxu0 0
    %620 = vmatprep.subr.bf16.mxu0 0
    %621 = vmatpush1.bf16.msra.mxu0 0
    %622 = vmatprep.subr.bf16.mxu0 0
    %623 = vmatpush1.bf16.msra.mxu0 0
    %624 = vmatprep.subr.bf16.mxu0 0
    %625 = vmatpush1.bf16.msra.mxu0 %v602
    %626 = vmatprep.subr.bf16.mxu0 0
    %627 = vmatpush2.bf16.msra.mxu0 0
    %628 = vmatprep.subr.bf16.mxu0 0
    %629 = vmatpush2.bf16.msra.mxu0 0
    %630 = vmatprep.subr.bf16.mxu0 0
    %631 = vmatpush2.bf16.msra.mxu0 0
    %632 = vmatprep.subr.bf16.mxu0 0
    %633 = vmatpush2.bf16.msra.mxu0 0
    %634 = vmatprep.subr.bf16.mxu0 0
    %635 = vmatpush2.bf16.msra.mxu0 0
    %636 = vmatprep.subr.bf16.mxu0 0
    %637 = vmatpush2.bf16.msra.mxu0 0
    %638 = vmatprep.subr.bf16.mxu0 0
    %639 = vmatpush2.bf16.msra.mxu0 0
    %640 = vmatprep.subr.bf16.mxu0 0
    %641 = vmatpush2.bf16.msra.mxu0 0
    %642 = vmatprep.mubr.bf16.mxu0 0
    %643 = vmatmul.mubr.bf16.gmra.mxu0 %v605
    %v644 = vpop.f32.mrf.mxu0
    %v645 = vadd.f32 0.0, %v644
    %v646 = vpop.f32.mrf.mxu0
    %v647 = vpop.f32.mrf.mxu0
    %v648 = vadd.f32 0.0, %v647
    %v649 = vpop.f32.mrf.mxu0
    %650 = vmatprep.mubr.bf16.mxu0 0
    %651 = vmatmul.mubr.bf16.gmra.mxu0 %v608
    %v652 = vpop.f32.mrf.mxu0
    %v653 = vadd.f32 0.0, %v652
    %v654 = vpop.f32.mrf.mxu0
    %v655 = vpop.f32.mrf.mxu0
    %v656 = vadd.f32 0.0, %v655
    %v657 = vpop.f32.mrf.mxu0
    %658 = vdwg.mxu0
    %659 = vst.msk [vmem:[#allocation3] sm:$0xff] %vm57, %v645
    %660 = vst.msk [vmem:[#allocation3 + $0x8] sm:$0xff] %vm57, %v648
    %661 = vst.msk [vmem:[#allocation3 + $0x10] sm:$0xff] %vm57, %v653
    %662 = vst.msk [vmem:[#allocation3 + $0x18] sm:$0xff] %vm57, %v656
    %v663 = vld [vmem:[#allocation2] sm:$0xf]
    %v664 = vld [vmem:[#allocation2 + $0x8] sm:$0xf]
    %v665 = vld [vmem:[#allocation2 + $0x10] sm:$0xf]
    %v666 = vld [vmem:[#allocation2 + $0x18] sm:$0xf]
    %v667 = vld [vmem:[#allocation2 + $0x4] sm:$0xf]
    %v668 = vld [vmem:[#allocation2 + $0xc] sm:$0xf]
    %v669 = vld [vmem:[#allocation2 + $0x14] sm:$0xf]
    %v670 = vld [vmem:[#allocation2 + $0x1c] sm:$0xf]
    %v672 = vunpack.c.l.b16 %v663
    %v673 = vpack.c.b16 %v672, %v672
    %674 = vrot.lane.b32.xlu0 %v673, 112
    %v675 = vpop.permute.xlu0 %674
    %676 = vrot.lane.b32.xlu0 %v673, 48
    %v677 = vpop.permute.xlu0 %676
    %v679 = vsel %vm161, %v675, 0
    %v682 = vsel %vm161, %v677, 0
    %684 = vmatprep.subr.bf16.mxu0 0
    %685 = vmatpush1.bf16.xpose.msra.mxu0 0
    %686 = vmatprep.subr.bf16.mxu0 0
    %687 = vmatpush1.bf16.xpose.msra.mxu0 0
    %688 = vmatprep.subr.bf16.mxu0 0
    %689 = vmatpush1.bf16.xpose.msra.mxu0 0
    %690 = vmatprep.subr.bf16.mxu0 0
    %691 = vmatpush1.bf16.xpose.msra.mxu0 0
    %692 = vmatprep.subr.bf16.mxu0 0
    %693 = vmatpush1.bf16.xpose.msra.mxu0 0
    %694 = vmatprep.subr.bf16.mxu0 0
    %695 = vmatpush1.bf16.xpose.msra.mxu0 0
    %696 = vmatprep.subr.bf16.mxu0 0
    %697 = vmatpush1.bf16.xpose.msra.mxu0 0
    %698 = vmatprep.subr.bf16.mxu0 0
    %699 = vmatpush1.bf16.xpose.msra.mxu0 %v682
    %700 = vmatprep.subr.bf16.mxu0 0
    %701 = vmatpush2.bf16.xpose.msra.mxu0 0
    %702 = vmatprep.subr.bf16.mxu0 0
    %703 = vmatpush2.bf16.xpose.msra.mxu0 0
    %704 = vmatprep.subr.bf16.mxu0 0
    %705 = vmatpush2.bf16.xpose.msra.mxu0 0
    %706 = vmatprep.subr.bf16.mxu0 0
    %707 = vmatpush2.bf16.xpose.msra.mxu0 0
    %708 = vmatprep.subr.bf16.mxu0 0
    %709 = vmatpush2.bf16.xpose.msra.mxu0 0
    %710 = vmatprep.subr.bf16.mxu0 0
    %711 = vmatpush2.bf16.xpose.msra.mxu0 0
    %712 = vmatprep.subr.bf16.mxu0 0
    %713 = vmatpush2.bf16.xpose.msra.mxu0 0
    %714 = vmatprep.subr.bf16.mxu0 0
    %715 = vmatpush2.bf16.xpose.msra.mxu0 0
    %716 = vmatprep.mubr.bf16.mxu0 0
    %717 = vmatmul.mubr.bf16.gmra.mxu0 %v679
    %v718 = vpop.f32.mrf.mxu0
    %v719 = vadd.f32 0.0, %v718
    %v720 = vpop.f32.mrf.mxu0
    %v721 = vpop.f32.mrf.mxu0
    %v722 = vpop.f32.mrf.mxu0
    %723 = vdwg.mxu0
    %v725 = vunpack.c.l.b16 %v664
    %v726 = vpack.c.b16 %v725, %v725
    %727 = vrot.lane.b32.xlu0 %v726, 112
    %v728 = vpop.permute.xlu0 %727
    %729 = vrot.lane.b32.xlu0 %v726, 48
    %v730 = vpop.permute.xlu0 %729
    %v732 = vsel %vm161, %v728, 0
    %v735 = vsel %vm161, %v730, 0
    %737 = vmatprep.subr.bf16.mxu0 0
    %738 = vmatpush1.bf16.xpose.msra.mxu0 0
    %739 = vmatprep.subr.bf16.mxu0 0
    %740 = vmatpush1.bf16.xpose.msra.mxu0 0
    %741 = vmatprep.subr.bf16.mxu0 0
    %742 = vmatpush1.bf16.xpose.msra.mxu0 0
    %743 = vmatprep.subr.bf16.mxu0 0
    %744 = vmatpush1.bf16.xpose.msra.mxu0 0
    %745 = vmatprep.subr.bf16.mxu0 0
    %746 = vmatpush1.bf16.xpose.msra.mxu0 0
    %747 = vmatprep.subr.bf16.mxu0 0
    %748 = vmatpush1.bf16.xpose.msra.mxu0 0
    %749 = vmatprep.subr.bf16.mxu0 0
    %750 = vmatpush1.bf16.xpose.msra.mxu0 0
    %751 = vmatprep.subr.bf16.mxu0 0
    %752 = vmatpush1.bf16.xpose.msra.mxu0 %v735
    %753 = vmatprep.subr.bf16.mxu0 0
    %754 = vmatpush2.bf16.xpose.msra.mxu0 0
    %755 = vmatprep.subr.bf16.mxu0 0
    %756 = vmatpush2.bf16.xpose.msra.mxu0 0
    %757 = vmatprep.subr.bf16.mxu0 0
    %758 = vmatpush2.bf16.xpose.msra.mxu0 0
    %759 = vmatprep.subr.bf16.mxu0 0
    %760 = vmatpush2.bf16.xpose.msra.mxu0 0
    %761 = vmatprep.subr.bf16.mxu0 0
    %762 = vmatpush2.bf16.xpose.msra.mxu0 0
    %763 = vmatprep.subr.bf16.mxu0 0
    %764 = vmatpush2.bf16.xpose.msra.mxu0 0
    %765 = vmatprep.subr.bf16.mxu0 0
    %766 = vmatpush2.bf16.xpose.msra.mxu0 0
    %767 = vmatprep.subr.bf16.mxu0 0
    %768 = vmatpush2.bf16.xpose.msra.mxu0 0
    %769 = vmatprep.mubr.bf16.mxu0 0
    %770 = vmatmul.mubr.bf16.gmra.mxu0 %v732
    %v771 = vpop.f32.mrf.mxu0
    %v772 = vadd.f32 0.0, %v771
    %v773 = vpop.f32.mrf.mxu0
    %v774 = vpop.f32.mrf.mxu0
    %v775 = vpop.f32.mrf.mxu0
    %776 = vdwg.mxu0
    %v778 = vunpack.c.l.b16 %v665
    %v779 = vpack.c.b16 %v778, %v778
    %780 = vrot.lane.b32.xlu0 %v779, 112
    %v781 = vpop.permute.xlu0 %780
    %782 = vrot.lane.b32.xlu0 %v779, 48
    %v783 = vpop.permute.xlu0 %782
    %v785 = vsel %vm161, %v781, 0
    %v788 = vsel %vm161, %v783, 0
    %790 = vmatprep.subr.bf16.mxu0 0
    %791 = vmatpush1.bf16.xpose.msra.mxu0 0
    %792 = vmatprep.subr.bf16.mxu0 0
    %793 = vmatpush1.bf16.xpose.msra.mxu0 0
    %794 = vmatprep.subr.bf16.mxu0 0
    %795 = vmatpush1.bf16.xpose.msra.mxu0 0
    %796 = vmatprep.subr.bf16.mxu0 0
    %797 = vmatpush1.bf16.xpose.msra.mxu0 0
    %798 = vmatprep.subr.bf16.mxu0 0
    %799 = vmatpush1.bf16.xpose.msra.mxu0 0
    %800 = vmatprep.subr.bf16.mxu0 0
    %801 = vmatpush1.bf16.xpose.msra.mxu0 0
    %802 = vmatprep.subr.bf16.mxu0 0
    %803 = vmatpush1.bf16.xpose.msra.mxu0 0
    %804 = vmatprep.subr.bf16.mxu0 0
    %805 = vmatpush1.bf16.xpose.msra.mxu0 %v788
    %806 = vmatprep.subr.bf16.mxu0 0
    %807 = vmatpush2.bf16.xpose.msra.mxu0 0
    %808 = vmatprep.subr.bf16.mxu0 0
    %809 = vmatpush2.bf16.xpose.msra.mxu0 0
    %810 = vmatprep.subr.bf16.mxu0 0
    %811 = vmatpush2.bf16.xpose.msra.mxu0 0
    %812 = vmatprep.subr.bf16.mxu0 0
    %813 = vmatpush2.bf16.xpose.msra.mxu0 0
    %814 = vmatprep.subr.bf16.mxu0 0
    %815 = vmatpush2.bf16.xpose.msra.mxu0 0
    %816 = vmatprep.subr.bf16.mxu0 0
    %817 = vmatpush2.bf16.xpose.msra.mxu0 0
    %818 = vmatprep.subr.bf16.mxu0 0
    %819 = vmatpush2.bf16.xpose.msra.mxu0 0
    %820 = vmatprep.subr.bf16.mxu0 0
    %821 = vmatpush2.bf16.xpose.msra.mxu0 0
    %822 = vmatprep.mubr.bf16.mxu0 0
    %823 = vmatmul.mubr.bf16.gmra.mxu0 %v785
    %v824 = vpop.f32.mrf.mxu0
    %v825 = vadd.f32 0.0, %v824
    %v826 = vpop.f32.mrf.mxu0
    %v827 = vpop.f32.mrf.mxu0
    %v828 = vpop.f32.mrf.mxu0
    %829 = vdwg.mxu0
    %v831 = vunpack.c.l.b16 %v666
    %v832 = vpack.c.b16 %v831, %v831
    %833 = vrot.lane.b32.xlu0 %v832, 112
    %v834 = vpop.permute.xlu0 %833
    %835 = vrot.lane.b32.xlu0 %v832, 48
    %v836 = vpop.permute.xlu0 %835
    %v838 = vsel %vm161, %v834, 0
    %v841 = vsel %vm161, %v836, 0
    %843 = vmatprep.subr.bf16.mxu0 0
    %844 = vmatpush1.bf16.xpose.msra.mxu0 0
    %845 = vmatprep.subr.bf16.mxu0 0
    %846 = vmatpush1.bf16.xpose.msra.mxu0 0
    %847 = vmatprep.subr.bf16.mxu0 0
    %848 = vmatpush1.bf16.xpose.msra.mxu0 0
    %849 = vmatprep.subr.bf16.mxu0 0
    %850 = vmatpush1.bf16.xpose.msra.mxu0 0
    %851 = vmatprep.subr.bf16.mxu0 0
    %852 = vmatpush1.bf16.xpose.msra.mxu0 0
    %853 = vmatprep.subr.bf16.mxu0 0
    %854 = vmatpush1.bf16.xpose.msra.mxu0 0
    %855 = vmatprep.subr.bf16.mxu0 0
    %856 = vmatpush1.bf16.xpose.msra.mxu0 0
    %857 = vmatprep.subr.bf16.mxu0 0
    %858 = vmatpush1.bf16.xpose.msra.mxu0 %v841
    %859 = vmatprep.subr.bf16.mxu0 0
    %860 = vmatpush2.bf16.xpose.msra.mxu0 0
    %861 = vmatprep.subr.bf16.mxu0 0
    %862 = vmatpush2.bf16.xpose.msra.mxu0 0
    %863 = vmatprep.subr.bf16.mxu0 0
    %864 = vmatpush2.bf16.xpose.msra.mxu0 0
    %865 = vmatprep.subr.bf16.mxu0 0
    %866 = vmatpush2.bf16.xpose.msra.mxu0 0
    %867 = vmatprep.subr.bf16.mxu0 0
    %868 = vmatpush2.bf16.xpose.msra.mxu0 0
    %869 = vmatprep.subr.bf16.mxu0 0
    %870 = vmatpush2.bf16.xpose.msra.mxu0 0
    %871 = vmatprep.subr.bf16.mxu0 0
    %872 = vmatpush2.bf16.xpose.msra.mxu0 0
    %873 = vmatprep.subr.bf16.mxu0 0
    %874 = vmatpush2.bf16.xpose.msra.mxu0 0
    %875 = vmatprep.mubr.bf16.mxu0 0
    %876 = vmatmul.mubr.bf16.gmra.mxu0 %v838
    %v877 = vpop.f32.mrf.mxu0
    %v878 = vadd.f32 0.0, %v877
    %v879 = vpop.f32.mrf.mxu0
    %v880 = vpop.f32.mrf.mxu0
    %v881 = vpop.f32.mrf.mxu0
    %882 = vdwg.mxu0
    %v883 = vsel %vm361, %v719, -inf
    %884 = vmax.xlane.f32.xlu0 %v883
    %v885 = vpop.xlane.xlu0 %884
    %v886 = vsel %vm361, %v772, -inf
    %887 = vmax.xlane.f32.xlu0 %v886
    %v888 = vpop.xlane.xlu0 %887
    %v889 = vsel %vm361, %v825, -inf
    %890 = vmax.xlane.f32.xlu0 %v889
    %v891 = vpop.xlane.xlu0 %890
    %v892 = vsel %vm361, %v878, -inf
    %893 = vmax.xlane.f32.xlu0 %v892
    %v894 = vpop.xlane.xlu0 %893
    %v895 = vsub.f32 %v719, %v885
    %v896 = vsub.f32 %v772, %v888
    %v897 = vsub.f32 %v825, %v891
    %v898 = vsub.f32 %v878, %v894
    %v899 = vmul.f32 %v895, 1.442695
    %v900 = vpow.pop %v899
    %v901 = vmul.f32 %v896, 1.442695
    %v902 = vpow.pop %v901
    %v903 = vmul.f32 %v897, 1.442695
    %v904 = vpow.pop %v903
    %v905 = vmul.f32 %v898, 1.442695
    %v906 = vpow.pop %v905
    %v907 = vsel %vm361, %v900, 0.0
    %908 = vadd.xlane.f32.xlu0 %v907
    %v909 = vpop.xlane.xlu0 %908
    %v910 = vsel %vm361, %v902, 0.0
    %911 = vadd.xlane.f32.xlu0 %v910
    %v912 = vpop.xlane.xlu0 %911
    %v913 = vsel %vm361, %v904, 0.0
    %914 = vadd.xlane.f32.xlu0 %v913
    %v915 = vpop.xlane.xlu0 %914
    %v916 = vsel %vm361, %v906, 0.0
    %917 = vadd.xlane.f32.xlu0 %v916
    %v918 = vpop.xlane.xlu0 %917
    %v919 = vpack.c.bf16 %v900, %v900
    %v920 = vpack.c.bf16 %v902, %v902
    %v921 = vpack.c.bf16 %v904, %v904
    %v922 = vpack.c.bf16 %v906, %v906
    %v924 = vunpack.c.l.b16 %v667
    %v925 = vpack.c.b16 %v924, %v924
    %926 = vrot.lane.b32.xlu0 %v925, 112
    %v927 = vpop.permute.xlu0 %926
    %v929 = vsel %vm361, %v919, 0
    %v932 = vsel %vm141, %v927, 0
    %934 = vmatprep.subr.bf16.mxu0 0
    %935 = vmatpush1.bf16.msra.mxu0 0
    %936 = vmatprep.subr.bf16.mxu0 0
    %937 = vmatpush1.bf16.msra.mxu0 0
    %938 = vmatprep.subr.bf16.mxu0 0
    %939 = vmatpush1.bf16.msra.mxu0 0
    %940 = vmatprep.subr.bf16.mxu0 0
    %941 = vmatpush1.bf16.msra.mxu0 0
    %942 = vmatprep.subr.bf16.mxu0 0
    %943 = vmatpush1.bf16.msra.mxu0 0
    %944 = vmatprep.subr.bf16.mxu0 0
    %945 = vmatpush1.bf16.msra.mxu0 0
    %946 = vmatprep.subr.bf16.mxu0 0
    %947 = vmatpush1.bf16.msra.mxu0 0
    %948 = vmatprep.subr.bf16.mxu0 0
    %949 = vmatpush1.bf16.msra.mxu0 %v932
    %950 = vmatprep.subr.bf16.mxu0 0
    %951 = vmatpush2.bf16.msra.mxu0 0
    %952 = vmatprep.subr.bf16.mxu0 0
    %953 = vmatpush2.bf16.msra.mxu0 0
    %954 = vmatprep.subr.bf16.mxu0 0
    %955 = vmatpush2.bf16.msra.mxu0 0
    %956 = vmatprep.subr.bf16.mxu0 0
    %957 = vmatpush2.bf16.msra.mxu0 0
    %958 = vmatprep.subr.bf16.mxu0 0
    %959 = vmatpush2.bf16.msra.mxu0 0
    %960 = vmatprep.subr.bf16.mxu0 0
    %961 = vmatpush2.bf16.msra.mxu0 0
    %962 = vmatprep.subr.bf16.mxu0 0
    %963 = vmatpush2.bf16.msra.mxu0 0
    %964 = vmatprep.subr.bf16.mxu0 0
    %965 = vmatpush2.bf16.msra.mxu0 0
    %966 = vmatprep.mubr.bf16.mxu0 0
    %967 = vmatmul.mubr.bf16.gmra.mxu0 %v929
    %v968 = vpop.f32.mrf.mxu0
    %v969 = vadd.f32 0.0, %v968
    %v970 = vpop.f32.mrf.mxu0
    %v971 = vpop.f32.mrf.mxu0
    %v972 = vpop.f32.mrf.mxu0
    %973 = vdwg.mxu0
    %v975 = vunpack.c.l.b16 %v668
    %v976 = vpack.c.b16 %v975, %v975
    %977 = vrot.lane.b32.xlu0 %v976, 112
    %v978 = vpop.permute.xlu0 %977
    %v980 = vsel %vm361, %v920, 0
    %v983 = vsel %vm141, %v978, 0
    %985 = vmatprep.subr.bf16.mxu0 0
    %986 = vmatpush1.bf16.msra.mxu0 0
    %987 = vmatprep.subr.bf16.mxu0 0
    %988 = vmatpush1.bf16.msra.mxu0 0
    %989 = vmatprep.subr.bf16.mxu0 0
    %990 = vmatpush1.bf16.msra.mxu0 0
    %991 = vmatprep.subr.bf16.mxu0 0
    %992 = vmatpush1.bf16.msra.mxu0 0
    %993 = vmatprep.subr.bf16.mxu0 0
    %994 = vmatpush1.bf16.msra.mxu0 0
    %995 = vmatprep.subr.bf16.mxu0 0
    %996 = vmatpush1.bf16.msra.mxu0 0
    %997 = vmatprep.subr.bf16.mxu0 0
    %998 = vmatpush1.bf16.msra.mxu0 0
    %999 = vmatprep.subr.bf16.mxu0 0
    %1000 = vmatpush1.bf16.msra.mxu0 %v983
    %1001 = vmatprep.subr.bf16.mxu0 0
    %1002 = vmatpush2.bf16.msra.mxu0 0
    %1003 = vmatprep.subr.bf16.mxu0 0
    %1004 = vmatpush2.bf16.msra.mxu0 0
    %1005 = vmatprep.subr.bf16.mxu0 0
    %1006 = vmatpush2.bf16.msra.mxu0 0
    %1007 = vmatprep.subr.bf16.mxu0 0
    %1008 = vmatpush2.bf16.msra.mxu0 0
    %1009 = vmatprep.subr.bf16.mxu0 0
    %1010 = vmatpush2.bf16.msra.mxu0 0
    %1011 = vmatprep.subr.bf16.mxu0 0
    %1012 = vmatpush2.bf16.msra.mxu0 0
    %1013 = vmatprep.subr.bf16.mxu0 0
    %1014 = vmatpush2.bf16.msra.mxu0 0
    %1015 = vmatprep.subr.bf16.mxu0 0
    %1016 = vmatpush2.bf16.msra.mxu0 0
    %1017 = vmatprep.mubr.bf16.mxu0 0
    %1018 = vmatmul.mubr.bf16.gmra.mxu0 %v980
    %v1019 = vpop.f32.mrf.mxu0
    %v1020 = vadd.f32 0.0, %v1019
    %v1021 = vpop.f32.mrf.mxu0
    %v1022 = vpop.f32.mrf.mxu0
    %v1023 = vpop.f32.mrf.mxu0
    %1024 = vdwg.mxu0
    %v1026 = vunpack.c.l.b16 %v669
    %v1027 = vpack.c.b16 %v1026, %v1026
    %1028 = vrot.lane.b32.xlu0 %v1027, 112
    %v1029 = vpop.permute.xlu0 %1028
    %v1031 = vsel %vm361, %v921, 0
    %v1034 = vsel %vm141, %v1029, 0
    %1036 = vmatprep.subr.bf16.mxu0 0
    %1037 = vmatpush1.bf16.msra.mxu0 0
    %1038 = vmatprep.subr.bf16.mxu0 0
    %1039 = vmatpush1.bf16.msra.mxu0 0
    %1040 = vmatprep.subr.bf16.mxu0 0
    %1041 = vmatpush1.bf16.msra.mxu0 0
    %1042 = vmatprep.subr.bf16.mxu0 0
    %1043 = vmatpush1.bf16.msra.mxu0 0
    %1044 = vmatprep.subr.bf16.mxu0 0
    %1045 = vmatpush1.bf16.msra.mxu0 0
    %1046 = vmatprep.subr.bf16.mxu0 0
    %1047 = vmatpush1.bf16.msra.mxu0 0
    %1048 = vmatprep.subr.bf16.mxu0 0
    %1049 = vmatpush1.bf16.msra.mxu0 0
    %1050 = vmatprep.subr.bf16.mxu0 0
    %1051 = vmatpush1.bf16.msra.mxu0 %v1034
    %1052 = vmatprep.subr.bf16.mxu0 0
    %1053 = vmatpush2.bf16.msra.mxu0 0
    %1054 = vmatprep.subr.bf16.mxu0 0
    %1055 = vmatpush2.bf16.msra.mxu0 0
    %1056 = vmatprep.subr.bf16.mxu0 0
    %1057 = vmatpush2.bf16.msra.mxu0 0
    %1058 = vmatprep.subr.bf16.mxu0 0
    %1059 = vmatpush2.bf16.msra.mxu0 0
    %1060 = vmatprep.subr.bf16.mxu0 0
    %1061 = vmatpush2.bf16.msra.mxu0 0
    %1062 = vmatprep.subr.bf16.mxu0 0
    %1063 = vmatpush2.bf16.msra.mxu0 0
    %1064 = vmatprep.subr.bf16.mxu0 0
    %1065 = vmatpush2.bf16.msra.mxu0 0
    %1066 = vmatprep.subr.bf16.mxu0 0
    %1067 = vmatpush2.bf16.msra.mxu0 0
    %1068 = vmatprep.mubr.bf16.mxu0 0
    %1069 = vmatmul.mubr.bf16.gmra.mxu0 %v1031
    %v1070 = vpop.f32.mrf.mxu0
    %v1071 = vadd.f32 0.0, %v1070
    %v1072 = vpop.f32.mrf.mxu0
    %v1073 = vpop.f32.mrf.mxu0
    %v1074 = vpop.f32.mrf.mxu0
    %1075 = vdwg.mxu0
    %v1077 = vunpack.c.l.b16 %v670
    %v1078 = vpack.c.b16 %v1077, %v1077
    %1079 = vrot.lane.b32.xlu0 %v1078, 112
    %v1080 = vpop.permute.xlu0 %1079
    %v1082 = vsel %vm361, %v922, 0
    %v1085 = vsel %vm141, %v1080, 0
    %1087 = vmatprep.subr.bf16.mxu0 0
    %1088 = vmatpush1.bf16.msra.mxu0 0
    %1089 = vmatprep.subr.bf16.mxu0 0
    %1090 = vmatpush1.bf16.msra.mxu0 0
    %1091 = vmatprep.subr.bf16.mxu0 0
    %1092 = vmatpush1.bf16.msra.mxu0 0
    %1093 = vmatprep.subr.bf16.mxu0 0
    %1094 = vmatpush1.bf16.msra.mxu0 0
    %1095 = vmatprep.subr.bf16.mxu0 0
    %1096 = vmatpush1.bf16.msra.mxu0 0
    %1097 = vmatprep.subr.bf16.mxu0 0
    %1098 = vmatpush1.bf16.msra.mxu0 0
    %1099 = vmatprep.subr.bf16.mxu0 0
    %1100 = vmatpush1.bf16.msra.mxu0 0
    %1101 = vmatprep.subr.bf16.mxu0 0
    %1102 = vmatpush1.bf16.msra.mxu0 %v1085
    %1103 = vmatprep.subr.bf16.mxu0 0
    %1104 = vmatpush2.bf16.msra.mxu0 0
    %1105 = vmatprep.subr.bf16.mxu0 0
    %1106 = vmatpush2.bf16.msra.mxu0 0
    %1107 = vmatprep.subr.bf16.mxu0 0
    %1108 = vmatpush2.bf16.msra.mxu0 0
    %1109 = vmatprep.subr.bf16.mxu0 0
    %1110 = vmatpush2.bf16.msra.mxu0 0
    %1111 = vmatprep.subr.bf16.mxu0 0
    %1112 = vmatpush2.bf16.msra.mxu0 0
    %1113 = vmatprep.subr.bf16.mxu0 0
    %1114 = vmatpush2.bf16.msra.mxu0 0
    %1115 = vmatprep.subr.bf16.mxu0 0
    %1116 = vmatpush2.bf16.msra.mxu0 0
    %1117 = vmatprep.subr.bf16.mxu0 0
    %1118 = vmatpush2.bf16.msra.mxu0 0
    %1119 = vmatprep.mubr.bf16.mxu0 0
    %1120 = vmatmul.mubr.bf16.gmra.mxu0 %v1082
    %v1121 = vpop.f32.mrf.mxu0
    %v1122 = vadd.f32 0.0, %v1121
    %v1123 = vpop.f32.mrf.mxu0
    %v1124 = vpop.f32.mrf.mxu0
    %v1125 = vpop.f32.mrf.mxu0
    %1126 = vdwg.mxu0
    %v1127 = vrcp.pop %v909
    %v1128 = vrcp.pop %v912
    %v1129 = vrcp.pop %v915
    %v1130 = vrcp.pop %v918
    %v1131 = vmul.f32 %v969, %v1127
    %v1132 = vmul.f32 %v1020, %v1128
    %v1133 = vmul.f32 %v1071, %v1129
    %v1134 = vmul.f32 %v1122, %v1130
    %v1135 = vpack.c.bf16 %v1132, %v1131
    %v1136 = vpack.c.bf16 %v1134, %v1133
    %v1137 = vld [vmem:[%s2 + $0x8] sm:$0xf]
    %v1138 = vld [vmem:[%s2 + $0xc] sm:$0xf]
    %v1141 = vunpack.c.l.b16 %v1137
    %v1142 = vunpack.c.l.b16 %v1138
    %v1143 = vpack.c.b16 %v1142, %v1141
    %v1146 = vsel %vm161, %v1135, 0
    %v1149 = vsel %vm161, %v1136, 0
    %1151 = vmatprep.subr.bf16.mxu0 0
    %1152 = vmatpush1.bf16.msra.mxu0 0
    %1153 = vmatprep.subr.bf16.mxu0 0
    %1154 = vmatpush1.bf16.msra.mxu0 0
    %1155 = vmatprep.subr.bf16.mxu0 0
    %1156 = vmatpush1.bf16.msra.mxu0 0
    %1157 = vmatprep.subr.bf16.mxu0 0
    %1158 = vmatpush1.bf16.msra.mxu0 0
    %1159 = vmatprep.subr.bf16.mxu0 0
    %1160 = vmatpush1.bf16.msra.mxu0 0
    %1161 = vmatprep.subr.bf16.mxu0 0
    %1162 = vmatpush1.bf16.msra.mxu0 0
    %1163 = vmatprep.subr.bf16.mxu0 0
    %1164 = vmatpush1.bf16.msra.mxu0 0
    %1165 = vmatprep.subr.bf16.mxu0 0
    %1166 = vmatpush1.bf16.msra.mxu0 %v1143
    %1167 = vmatprep.subr.bf16.mxu0 0
    %1168 = vmatpush2.bf16.msra.mxu0 0
    %1169 = vmatprep.subr.bf16.mxu0 0
    %1170 = vmatpush2.bf16.msra.mxu0 0
    %1171 = vmatprep.subr.bf16.mxu0 0
    %1172 = vmatpush2.bf16.msra.mxu0 0
    %1173 = vmatprep.subr.bf16.mxu0 0
    %1174 = vmatpush2.bf16.msra.mxu0 0
    %1175 = vmatprep.subr.bf16.mxu0 0
    %1176 = vmatpush2.bf16.msra.mxu0 0
    %1177 = vmatprep.subr.bf16.mxu0 0
    %1178 = vmatpush2.bf16.msra.mxu0 0
    %1179 = vmatprep.subr.bf16.mxu0 0
    %1180 = vmatpush2.bf16.msra.mxu0 0
    %1181 = vmatprep.subr.bf16.mxu0 0
    %1182 = vmatpush2.bf16.msra.mxu0 0
    %1183 = vmatprep.mubr.bf16.mxu0 0
    %1184 = vmatmul.mubr.bf16.gmra.mxu0 %v1146
    %v1185 = vpop.f32.mrf.mxu0
    %v1186 = vadd.f32 0.0, %v1185
    %v1187 = vpop.f32.mrf.mxu0
    %v1188 = vpop.f32.mrf.mxu0
    %v1189 = vadd.f32 0.0, %v1188
    %v1190 = vpop.f32.mrf.mxu0
    %1191 = vmatprep.mubr.bf16.mxu0 0
    %1192 = vmatmul.mubr.bf16.gmra.mxu0 %v1149
    %v1193 = vpop.f32.mrf.mxu0
    %v1194 = vadd.f32 0.0, %v1193
    %v1195 = vpop.f32.mrf.mxu0
    %v1196 = vpop.f32.mrf.mxu0
    %v1197 = vadd.f32 0.0, %v1196
    %v1198 = vpop.f32.mrf.mxu0
    %1199 = vdwg.mxu0
    %v1200 = vld [vmem:[#allocation3] sm:$0xff]
    %v1201 = vld [vmem:[#allocation3 + $0x8] sm:$0xff]
    %v1202 = vld [vmem:[#allocation3 + $0x10] sm:$0xff]
    %v1203 = vld [vmem:[#allocation3 + $0x18] sm:$0xff]
    %v1204 = vadd.f32 %v1200, %v1186
    %v1205 = vadd.f32 %v1201, %v1189
    %v1206 = vadd.f32 %v1202, %v1194
    %v1207 = vadd.f32 %v1203, %v1197
    %1208 = vst.msk [vmem:[#allocation3] sm:$0xff] %vm57, %v1204
    %1209 = vst.msk [vmem:[#allocation3 + $0x8] sm:$0xff] %vm57, %v1205
    %1210 = vst.msk [vmem:[#allocation3 + $0x10] sm:$0xff] %vm57, %v1206
    %1211 = vst.msk [vmem:[#allocation3 + $0x18] sm:$0xff] %vm57, %v1207
    %v1212 = vld [vmem:[#allocation2] sm:$0xf]
    %v1213 = vld [vmem:[#allocation2 + $0x8] sm:$0xf]
    %v1214 = vld [vmem:[#allocation2 + $0x10] sm:$0xf]
    %v1215 = vld [vmem:[#allocation2 + $0x18] sm:$0xf]
    %v1216 = vld [vmem:[#allocation2 + $0x4] sm:$0xf]
    %v1217 = vld [vmem:[#allocation2 + $0xc] sm:$0xf]
    %v1218 = vld [vmem:[#allocation2 + $0x14] sm:$0xf]
    %v1219 = vld [vmem:[#allocation2 + $0x1c] sm:$0xf]
    %v1221 = vunpack.c.l.b16 %v1212
    %v1222 = vpack.c.b16 %v1221, %v1221
    %1223 = vrot.lane.b32.xlu0 %v1222, 96
    %v1224 = vpop.permute.xlu0 %1223
    %1225 = vrot.lane.b32.xlu0 %v1222, 32
    %v1226 = vpop.permute.xlu0 %1225
    %v1228 = vsel %vm161, %v1224, 0
    %v1231 = vsel %vm161, %v1226, 0
    %1233 = vmatprep.subr.bf16.mxu0 0
    %1234 = vmatpush1.bf16.xpose.msra.mxu0 0
    %1235 = vmatprep.subr.bf16.mxu0 0
    %1236 = vmatpush1.bf16.xpose.msra.mxu0 0
    %1237 = vmatprep.subr.bf16.mxu0 0
    %1238 = vmatpush1.bf16.xpose.msra.mxu0 0
    %1239 = vmatprep.subr.bf16.mxu0 0
    %1240 = vmatpush1.bf16.xpose.msra.mxu0 0
    %1241 = vmatprep.subr.bf16.mxu0 0
    %1242 = vmatpush1.bf16.xpose.msra.mxu0 0
    %1243 = vmatprep.subr.bf16.mxu0 0
    %1244 = vmatpush1.bf16.xpose.msra.mxu0 0
    %1245 = vmatprep.subr.bf16.mxu0 0
    %1246 = vmatpush1.bf16.xpose.msra.mxu0 0
    %1247 = vmatprep.subr.bf16.mxu0 0
    %1248 = vmatpush1.bf16.xpose.msra.mxu0 %v1231
    %1249 = vmatprep.subr.bf16.mxu0 0
    %1250 = vmatpush2.bf16.xpose.msra.mxu0 0
    %1251 = vmatprep.subr.bf16.mxu0 0
    %1252 = vmatpush2.bf16.xpose.msra.mxu0 0
    %1253 = vmatprep.subr.bf16.mxu0 0
    %1254 = vmatpush2.bf16.xpose.msra.mxu0 0
    %1255 = vmatprep.subr.bf16.mxu0 0
    %1256 = vmatpush2.bf16.xpose.msra.mxu0 0
    %1257 = vmatprep.subr.bf16.mxu0 0
    %1258 = vmatpush2.bf16.xpose.msra.mxu0 0
    %1259 = vmatprep.subr.bf16.mxu0 0
    %1260 = vmatpush2.bf16.xpose.msra.mxu0 0
    %1261 = vmatprep.subr.bf16.mxu0 0
    %1262 = vmatpush2.bf16.xpose.msra.mxu0 0
    %1263 = vmatprep.subr.bf16.mxu0 0
    %1264 = vmatpush2.bf16.xpose.msra.mxu0 0
    %1265 = vmatprep.mubr.bf16.mxu0 0
    %1266 = vmatmul.mubr.bf16.gmra.mxu0 %v1228
    %v1267 = vpop.f32.mrf.mxu0
    %v1268 = vadd.f32 0.0, %v1267
    %v1269 = vpop.f32.mrf.mxu0
    %v1270 = vpop.f32.mrf.mxu0
    %v1271 = vpop.f32.mrf.mxu0
    %1272 = vdwg.mxu0
    %v1274 = vunpack.c.l.b16 %v1213
    %v1275 = vpack.c.b16 %v1274, %v1274
    %1276 = vrot.lane.b32.xlu0 %v1275, 96
    %v1277 = vpop.permute.xlu0 %1276
    %1278 = vrot.lane.b32.xlu0 %v1275, 32
    %v1279 = vpop.permute.xlu0 %1278
    %v1281 = vsel %vm161, %v1277, 0
    %v1284 = vsel %vm161, %v1279, 0
    %1286 = vmatprep.subr.bf16.mxu0 0
    %1287 = vmatpush1.bf16.xpose.msra.mxu0 0
    %1288 = vmatprep.subr.bf16.mxu0 0
    %1289 = vmatpush1.bf16.xpose.msra.mxu0 0
    %1290 = vmatprep.subr.bf16.mxu0 0
    %1291 = vmatpush1.bf16.xpose.msra.mxu0 0
    %1292 = vmatprep.subr.bf16.mxu0 0
    %1293 = vmatpush1.bf16.xpose.msra.mxu0 0
    %1294 = vmatprep.subr.bf16.mxu0 0
    %1295 = vmatpush1.bf16.xpose.msra.mxu0 0
    %1296 = vmatprep.subr.bf16.mxu0 0
    %1297 = vmatpush1.bf16.xpose.msra.mxu0 0
    %1298 = vmatprep.subr.bf16.mxu0 0
    %1299 = vmatpush1.bf16.xpose.msra.mxu0 0
    %1300 = vmatprep.subr.bf16.mxu0 0
    %1301 = vmatpush1.bf16.xpose.msra.mxu0 %v1284
    %1302 = vmatprep.subr.bf16.mxu0 0
    %1303 = vmatpush2.bf16.xpose.msra.mxu0 0
    %1304 = vmatprep.subr.bf16.mxu0 0
    %1305 = vmatpush2.bf16.xpose.msra.mxu0 0
    %1306 = vmatprep.subr.bf16.mxu0 0
    %1307 = vmatpush2.bf16.xpose.msra.mxu0 0
    %1308 = vmatprep.subr.bf16.mxu0 0
    %1309 = vmatpush2.bf16.xpose.msra.mxu0 0
    %1310 = vmatprep.subr.bf16.mxu0 0
    %1311 = vmatpush2.bf16.xpose.msra.mxu0 0
    %1312 = vmatprep.subr.bf16.mxu0 0
    %1313 = vmatpush2.bf16.xpose.msra.mxu0 0
    %1314 = vmatprep.subr.bf16.mxu0 0
    %1315 = vmatpush2.bf16.xpose.msra.mxu0 0
    %1316 = vmatprep.subr.bf16.mxu0 0
    %1317 = vmatpush2.bf16.xpose.msra.mxu0 0
    %1318 = vmatprep.mubr.bf16.mxu0 0
    %1319 = vmatmul.mubr.bf16.gmra.mxu0 %v1281
    %v1320 = vpop.f32.mrf.mxu0
    %v1321 = vadd.f32 0.0, %v1320
    %v1322 = vpop.f32.mrf.mxu0
    %v1323 = vpop.f32.mrf.mxu0
    %v1324 = vpop.f32.mrf.mxu0
    %1325 = vdwg.mxu0
    %v1327 = vunpack.c.l.b16 %v1214
    %v1328 = vpack.c.b16 %v1327, %v1327
    %1329 = vrot.lane.b32.xlu0 %v1328, 96
    %v1330 = vpop.permute.xlu0 %1329
    %1331 = vrot.lane.b32.xlu0 %v1328, 32
    %v1332 = vpop.permute.xlu0 %1331
    %v1334 = vsel %vm161, %v1330, 0
    %v1337 = vsel %vm161, %v1332, 0
    %1339 = vmatprep.subr.bf16.mxu0 0
    %1340 = vmatpush1.bf16.xpose.msra.mxu0 0
    %1341 = vmatprep.subr.bf16.mxu0 0
    %1342 = vmatpush1.bf16.xpose.msra.mxu0 0
    %1343 = vmatprep.subr.bf16.mxu0 0
    %1344 = vmatpush1.bf16.xpose.msra.mxu0 0
    %1345 = vmatprep.subr.bf16.mxu0 0
    %1346 = vmatpush1.bf16.xpose.msra.mxu0 0
    %1347 = vmatprep.subr.bf16.mxu0 0
    %1348 = vmatpush1.bf16.xpose.msra.mxu0 0
    %1349 = vmatprep.subr.bf16.mxu0 0
    %1350 = vmatpush1.bf16.xpose.msra.mxu0 0
    %1351 = vmatprep.subr.bf16.mxu0 0
    %1352 = vmatpush1.bf16.xpose.msra.mxu0 0
    %1353 = vmatprep.subr.bf16.mxu0 0
    %1354 = vmatpush1.bf16.xpose.msra.mxu0 %v1337
    %1355 = vmatprep.subr.bf16.mxu0 0
    %1356 = vmatpush2.bf16.xpose.msra.mxu0 0
    %1357 = vmatprep.subr.bf16.mxu0 0
    %1358 = vmatpush2.bf16.xpose.msra.mxu0 0
    %1359 = vmatprep.subr.bf16.mxu0 0
    %1360 = vmatpush2.bf16.xpose.msra.mxu0 0
    %1361 = vmatprep.subr.bf16.mxu0 0
    %1362 = vmatpush2.bf16.xpose.msra.mxu0 0
    %1363 = vmatprep.subr.bf16.mxu0 0
    %1364 = vmatpush2.bf16.xpose.msra.mxu0 0
    %1365 = vmatprep.subr.bf16.mxu0 0
    %1366 = vmatpush2.bf16.xpose.msra.mxu0 0
    %1367 = vmatprep.subr.bf16.mxu0 0
    %1368 = vmatpush2.bf16.xpose.msra.mxu0 0
    %1369 = vmatprep.subr.bf16.mxu0 0
    %1370 = vmatpush2.bf16.xpose.msra.mxu0 0
    %1371 = vmatprep.mubr.bf16.mxu0 0
    %1372 = vmatmul.mubr.bf16.gmra.mxu0 %v1334
    %v1373 = vpop.f32.mrf.mxu0
    %v1374 = vadd.f32 0.0, %v1373
    %v1375 = vpop.f32.mrf.mxu0
    %v1376 = vpop.f32.mrf.mxu0
    %v1377 = vpop.f32.mrf.mxu0
    %1378 = vdwg.mxu0
    %v1380 = vunpack.c.l.b16 %v1215
    %v1381 = vpack.c.b16 %v1380, %v1380
    %1382 = vrot.lane.b32.xlu0 %v1381, 96
    %v1383 = vpop.permute.xlu0 %1382
    %1384 = vrot.lane.b32.xlu0 %v1381, 32
    %v1385 = vpop.permute.xlu0 %1384
    %v1387 = vsel %vm161, %v1383, 0
    %v1390 = vsel %vm161, %v1385, 0
    %1392 = vmatprep.subr.bf16.mxu0 0
    %1393 = vmatpush1.bf16.xpose.msra.mxu0 0
    %1394 = vmatprep.subr.bf16.mxu0 0
    %1395 = vmatpush1.bf16.xpose.msra.mxu0 0
    %1396 = vmatprep.subr.bf16.mxu0 0
    %1397 = vmatpush1.bf16.xpose.msra.mxu0 0
    %1398 = vmatprep.subr.bf16.mxu0 0
    %1399 = vmatpush1.bf16.xpose.msra.mxu0 0
    %1400 = vmatprep.subr.bf16.mxu0 0
    %1401 = vmatpush1.bf16.xpose.msra.mxu0 0
    %1402 = vmatprep.subr.bf16.mxu0 0
    %1403 = vmatpush1.bf16.xpose.msra.mxu0 0
    %1404 = vmatprep.subr.bf16.mxu0 0
    %1405 = vmatpush1.bf16.xpose.msra.mxu0 0
    %1406 = vmatprep.subr.bf16.mxu0 0
    %1407 = vmatpush1.bf16.xpose.msra.mxu0 %v1390
    %1408 = vmatprep.subr.bf16.mxu0 0
    %1409 = vmatpush2.bf16.xpose.msra.mxu0 0
    %1410 = vmatprep.subr.bf16.mxu0 0
    %1411 = vmatpush2.bf16.xpose.msra.mxu0 0
    %1412 = vmatprep.subr.bf16.mxu0 0
    %1413 = vmatpush2.bf16.xpose.msra.mxu0 0
    %1414 = vmatprep.subr.bf16.mxu0 0
    %1415 = vmatpush2.bf16.xpose.msra.mxu0 0
    %1416 = vmatprep.subr.bf16.mxu0 0
    %1417 = vmatpush2.bf16.xpose.msra.mxu0 0
    %1418 = vmatprep.subr.bf16.mxu0 0
    %1419 = vmatpush2.bf16.xpose.msra.mxu0 0
    %1420 = vmatprep.subr.bf16.mxu0 0
    %1421 = vmatpush2.bf16.xpose.msra.mxu0 0
    %1422 = vmatprep.subr.bf16.mxu0 0
    %1423 = vmatpush2.bf16.xpose.msra.mxu0 0
    %1424 = vmatprep.mubr.bf16.mxu0 0
    %1425 = vmatmul.mubr.bf16.gmra.mxu0 %v1387
    %v1426 = vpop.f32.mrf.mxu0
    %v1427 = vadd.f32 0.0, %v1426
    %v1428 = vpop.f32.mrf.mxu0
    %v1429 = vpop.f32.mrf.mxu0
    %v1430 = vpop.f32.mrf.mxu0
    %1431 = vdwg.mxu0
    %v1432 = vsel %vm361, %v1268, -inf
    %1433 = vmax.xlane.f32.xlu0 %v1432
    %v1434 = vpop.xlane.xlu0 %1433
    %v1435 = vsel %vm361, %v1321, -inf
    %1436 = vmax.xlane.f32.xlu0 %v1435
    %v1437 = vpop.xlane.xlu0 %1436
    %v1438 = vsel %vm361, %v1374, -inf
    %1439 = vmax.xlane.f32.xlu0 %v1438
    %v1440 = vpop.xlane.xlu0 %1439
    %v1441 = vsel %vm361, %v1427, -inf
    %1442 = vmax.xlane.f32.xlu0 %v1441
    %v1443 = vpop.xlane.xlu0 %1442
    %v1444 = vsub.f32 %v1268, %v1434
    %v1445 = vsub.f32 %v1321, %v1437
    %v1446 = vsub.f32 %v1374, %v1440
    %v1447 = vsub.f32 %v1427, %v1443
    %v1448 = vmul.f32 %v1444, 1.442695
    %v1449 = vpow.pop %v1448
    %v1450 = vmul.f32 %v1445, 1.442695
    %v1451 = vpow.pop %v1450
    %v1452 = vmul.f32 %v1446, 1.442695
    %v1453 = vpow.pop %v1452
    %v1454 = vmul.f32 %v1447, 1.442695
    %v1455 = vpow.pop %v1454
    %v1456 = vsel %vm361, %v1449, 0.0
    %1457 = vadd.xlane.f32.xlu0 %v1456
    %v1458 = vpop.xlane.xlu0 %1457
    %v1459 = vsel %vm361, %v1451, 0.0
    %1460 = vadd.xlane.f32.xlu0 %v1459
    %v1461 = vpop.xlane.xlu0 %1460
    %v1462 = vsel %vm361, %v1453, 0.0
    %1463 = vadd.xlane.f32.xlu0 %v1462
    %v1464 = vpop.xlane.xlu0 %1463
    %v1465 = vsel %vm361, %v1455, 0.0
    %1466 = vadd.xlane.f32.xlu0 %v1465
    %v1467 = vpop.xlane.xlu0 %1466
    %v1468 = vpack.c.bf16 %v1449, %v1449
    %v1469 = vpack.c.bf16 %v1451, %v1451
    %v1470 = vpack.c.bf16 %v1453, %v1453
    %v1471 = vpack.c.bf16 %v1455, %v1455
    %v1473 = vunpack.c.l.b16 %v1216
    %v1474 = vpack.c.b16 %v1473, %v1473
    %1475 = vrot.lane.b32.xlu0 %v1474, 96
    %v1476 = vpop.permute.xlu0 %1475
    %v1478 = vsel %vm361, %v1468, 0
    %v1481 = vsel %vm141, %v1476, 0
    %1483 = vmatprep.subr.bf16.mxu0 0
    %1484 = vmatpush1.bf16.msra.mxu0 0
    %1485 = vmatprep.subr.bf16.mxu0 0
    %1486 = vmatpush1.bf16.msra.mxu0 0
    %1487 = vmatprep.subr.bf16.mxu0 0
    %1488 = vmatpush1.bf16.msra.mxu0 0
    %1489 = vmatprep.subr.bf16.mxu0 0
    %1490 = vmatpush1.bf16.msra.mxu0 0
    %1491 = vmatprep.subr.bf16.mxu0 0
    %1492 = vmatpush1.bf16.msra.mxu0 0
    %1493 = vmatprep.subr.bf16.mxu0 0
    %1494 = vmatpush1.bf16.msra.mxu0 0
    %1495 = vmatprep.subr.bf16.mxu0 0
    %1496 = vmatpush1.bf16.msra.mxu0 0
    %1497 = vmatprep.subr.bf16.mxu0 0
    %1498 = vmatpush1.bf16.msra.mxu0 %v1481
    %1499 = vmatprep.subr.bf16.mxu0 0
    %1500 = vmatpush2.bf16.msra.mxu0 0
    %1501 = vmatprep.subr.bf16.mxu0 0
    %1502 = vmatpush2.bf16.msra.mxu0 0
    %1503 = vmatprep.subr.bf16.mxu0 0
    %1504 = vmatpush2.bf16.msra.mxu0 0
    %1505 = vmatprep.subr.bf16.mxu0 0
    %1506 = vmatpush2.bf16.msra.mxu0 0
    %1507 = vmatprep.subr.bf16.mxu0 0
    %1508 = vmatpush2.bf16.msra.mxu0 0
    %1509 = vmatprep.subr.bf16.mxu0 0
    %1510 = vmatpush2.bf16.msra.mxu0 0
    %1511 = vmatprep.subr.bf16.mxu0 0
    %1512 = vmatpush2.bf16.msra.mxu0 0
    %1513 = vmatprep.subr.bf16.mxu0 0
    %1514 = vmatpush2.bf16.msra.mxu0 0
    %1515 = vmatprep.mubr.bf16.mxu0 0
    %1516 = vmatmul.mubr.bf16.gmra.mxu0 %v1478
    %v1517 = vpop.f32.mrf.mxu0
    %v1518 = vadd.f32 0.0, %v1517
    %v1519 = vpop.f32.mrf.mxu0
    %v1520 = vpop.f32.mrf.mxu0
    %v1521 = vpop.f32.mrf.mxu0
    %1522 = vdwg.mxu0
    %v1524 = vunpack.c.l.b16 %v1217
    %v1525 = vpack.c.b16 %v1524, %v1524
    %1526 = vrot.lane.b32.xlu0 %v1525, 96
    %v1527 = vpop.permute.xlu0 %1526
    %v1529 = vsel %vm361, %v1469, 0
    %v1532 = vsel %vm141, %v1527, 0
    %1534 = vmatprep.subr.bf16.mxu0 0
    %1535 = vmatpush1.bf16.msra.mxu0 0
    %1536 = vmatprep.subr.bf16.mxu0 0
    %1537 = vmatpush1.bf16.msra.mxu0 0
    %1538 = vmatprep.subr.bf16.mxu0 0
    %1539 = vmatpush1.bf16.msra.mxu0 0
    %1540 = vmatprep.subr.bf16.mxu0 0
    %1541 = vmatpush1.bf16.msra.mxu0 0
    %1542 = vmatprep.subr.bf16.mxu0 0
    %1543 = vmatpush1.bf16.msra.mxu0 0
    %1544 = vmatprep.subr.bf16.mxu0 0
    %1545 = vmatpush1.bf16.msra.mxu0 0
    %1546 = vmatprep.subr.bf16.mxu0 0
    %1547 = vmatpush1.bf16.msra.mxu0 0
    %1548 = vmatprep.subr.bf16.mxu0 0
    %1549 = vmatpush1.bf16.msra.mxu0 %v1532
    %1550 = vmatprep.subr.bf16.mxu0 0
    %1551 = vmatpush2.bf16.msra.mxu0 0
    %1552 = vmatprep.subr.bf16.mxu0 0
    %1553 = vmatpush2.bf16.msra.mxu0 0
    %1554 = vmatprep.subr.bf16.mxu0 0
    %1555 = vmatpush2.bf16.msra.mxu0 0
    %1556 = vmatprep.subr.bf16.mxu0 0
    %1557 = vmatpush2.bf16.msra.mxu0 0
    %1558 = vmatprep.subr.bf16.mxu0 0
    %1559 = vmatpush2.bf16.msra.mxu0 0
    %1560 = vmatprep.subr.bf16.mxu0 0
    %1561 = vmatpush2.bf16.msra.mxu0 0
    %1562 = vmatprep.subr.bf16.mxu0 0
    %1563 = vmatpush2.bf16.msra.mxu0 0
    %1564 = vmatprep.subr.bf16.mxu0 0
    %1565 = vmatpush2.bf16.msra.mxu0 0
    %1566 = vmatprep.mubr.bf16.mxu0 0
    %1567 = vmatmul.mubr.bf16.gmra.mxu0 %v1529
    %v1568 = vpop.f32.mrf.mxu0
    %v1569 = vadd.f32 0.0, %v1568
    %v1570 = vpop.f32.mrf.mxu0
    %v1571 = vpop.f32.mrf.mxu0
    %v1572 = vpop.f32.mrf.mxu0
    %1573 = vdwg.mxu0
    %v1575 = vunpack.c.l.b16 %v1218
    %v1576 = vpack.c.b16 %v1575, %v1575
    %1577 = vrot.lane.b32.xlu0 %v1576, 96
    %v1578 = vpop.permute.xlu0 %1577
    %v1580 = vsel %vm361, %v1470, 0
    %v1583 = vsel %vm141, %v1578, 0
    %1585 = vmatprep.subr.bf16.mxu0 0
    %1586 = vmatpush1.bf16.msra.mxu0 0
    %1587 = vmatprep.subr.bf16.mxu0 0
    %1588 = vmatpush1.bf16.msra.mxu0 0
    %1589 = vmatprep.subr.bf16.mxu0 0
    %1590 = vmatpush1.bf16.msra.mxu0 0
    %1591 = vmatprep.subr.bf16.mxu0 0
    %1592 = vmatpush1.bf16.msra.mxu0 0
    %1593 = vmatprep.subr.bf16.mxu0 0
    %1594 = vmatpush1.bf16.msra.mxu0 0
    %1595 = vmatprep.subr.bf16.mxu0 0
    %1596 = vmatpush1.bf16.msra.mxu0 0
    %1597 = vmatprep.subr.bf16.mxu0 0
    %1598 = vmatpush1.bf16.msra.mxu0 0
    %1599 = vmatprep.subr.bf16.mxu0 0
    %1600 = vmatpush1.bf16.msra.mxu0 %v1583
    %1601 = vmatprep.subr.bf16.mxu0 0
    %1602 = vmatpush2.bf16.msra.mxu0 0
    %1603 = vmatprep.subr.bf16.mxu0 0
    %1604 = vmatpush2.bf16.msra.mxu0 0
    %1605 = vmatprep.subr.bf16.mxu0 0
    %1606 = vmatpush2.bf16.msra.mxu0 0
    %1607 = vmatprep.subr.bf16.mxu0 0
    %1608 = vmatpush2.bf16.msra.mxu0 0
    %1609 = vmatprep.subr.bf16.mxu0 0
    %1610 = vmatpush2.bf16.msra.mxu0 0
    %1611 = vmatprep.subr.bf16.mxu0 0
    %1612 = vmatpush2.bf16.msra.mxu0 0
    %1613 = vmatprep.subr.bf16.mxu0 0
    %1614 = vmatpush2.bf16.msra.mxu0 0
    %1615 = vmatprep.subr.bf16.mxu0 0
    %1616 = vmatpush2.bf16.msra.mxu0 0
    %1617 = vmatprep.mubr.bf16.mxu0 0
    %1618 = vmatmul.mubr.bf16.gmra.mxu0 %v1580
    %v1619 = vpop.f32.mrf.mxu0
    %v1620 = vadd.f32 0.0, %v1619
    %v1621 = vpop.f32.mrf.mxu0
    %v1622 = vpop.f32.mrf.mxu0
    %v1623 = vpop.f32.mrf.mxu0
    %1624 = vdwg.mxu0
    %v1626 = vunpack.c.l.b16 %v1219
    %v1627 = vpack.c.b16 %v1626, %v1626
    %1628 = vrot.lane.b32.xlu0 %v1627, 96
    %v1629 = vpop.permute.xlu0 %1628
    %v1631 = vsel %vm361, %v1471, 0
    %v1634 = vsel %vm141, %v1629, 0
    %1636 = vmatprep.subr.bf16.mxu0 0
    %1637 = vmatpush1.bf16.msra.mxu0 0
    %1638 = vmatprep.subr.bf16.mxu0 0
    %1639 = vmatpush1.bf16.msra.mxu0 0
    %1640 = vmatprep.subr.bf16.mxu0 0
    %1641 = vmatpush1.bf16.msra.mxu0 0
    %1642 = vmatprep.subr.bf16.mxu0 0
    %1643 = vmatpush1.bf16.msra.mxu0 0
    %1644 = vmatprep.subr.bf16.mxu0 0
    %1645 = vmatpush1.bf16.msra.mxu0 0
    %1646 = vmatprep.subr.bf16.mxu0 0
    %1647 = vmatpush1.bf16.msra.mxu0 0
    %1648 = vmatprep.subr.bf16.mxu0 0
    %1649 = vmatpush1.bf16.msra.mxu0 0
    %1650 = vmatprep.subr.bf16.mxu0 0
    %1651 = vmatpush1.bf16.msra.mxu0 %v1634
    %1652 = vmatprep.subr.bf16.mxu0 0
    %1653 = vmatpush2.bf16.msra.mxu0 0
    %1654 = vmatprep.subr.bf16.mxu0 0
    %1655 = vmatpush2.bf16.msra.mxu0 0
    %1656 = vmatprep.subr.bf16.mxu0 0
    %1657 = vmatpush2.bf16.msra.mxu0 0
    %1658 = vmatprep.subr.bf16.mxu0 0
    %1659 = vmatpush2.bf16.msra.mxu0 0
    %1660 = vmatprep.subr.bf16.mxu0 0
    %1661 = vmatpush2.bf16.msra.mxu0 0
    %1662 = vmatprep.subr.bf16.mxu0 0
    %1663 = vmatpush2.bf16.msra.mxu0 0
    %1664 = vmatprep.subr.bf16.mxu0 0
    %1665 = vmatpush2.bf16.msra.mxu0 0
    %1666 = vmatprep.subr.bf16.mxu0 0
    %1667 = vmatpush2.bf16.msra.mxu0 0
    %1668 = vmatprep.mubr.bf16.mxu0 0
    %1669 = vmatmul.mubr.bf16.gmra.mxu0 %v1631
    %v1670 = vpop.f32.mrf.mxu0
    %v1671 = vadd.f32 0.0, %v1670
    %v1672 = vpop.f32.mrf.mxu0
    %v1673 = vpop.f32.mrf.mxu0
    %v1674 = vpop.f32.mrf.mxu0
    %1675 = vdwg.mxu0
    %v1676 = vrcp.pop %v1458
    %v1677 = vrcp.pop %v1461
    %v1678 = vrcp.pop %v1464
    %v1679 = vrcp.pop %v1467
    %v1680 = vmul.f32 %v1518, %v1676
    %v1681 = vmul.f32 %v1569, %v1677
    %v1682 = vmul.f32 %v1620, %v1678
    %v1683 = vmul.f32 %v1671, %v1679
    %v1684 = vpack.c.bf16 %v1681, %v1680
    %v1685 = vpack.c.bf16 %v1683, %v1682
    %v1686 = vld [vmem:[%s2 + $0x10] sm:$0xf]
    %v1687 = vld [vmem:[%s2 + $0x14] sm:$0xf]
    %v1690 = vunpack.c.l.b16 %v1686
    %v1691 = vunpack.c.l.b16 %v1687
    %v1692 = vpack.c.b16 %v1691, %v1690
    %v1695 = vsel %vm161, %v1684, 0
    %v1698 = vsel %vm161, %v1685, 0
    %1700 = vmatprep.subr.bf16.mxu0 0
    %1701 = vmatpush1.bf16.msra.mxu0 0
    %1702 = vmatprep.subr.bf16.mxu0 0
    %1703 = vmatpush1.bf16.msra.mxu0 0
    %1704 = vmatprep.subr.bf16.mxu0 0
    %1705 = vmatpush1.bf16.msra.mxu0 0
    %1706 = vmatprep.subr.bf16.mxu0 0
    %1707 = vmatpush1.bf16.msra.mxu0 0
    %1708 = vmatprep.subr.bf16.mxu0 0
    %1709 = vmatpush1.bf16.msra.mxu0 0
    %1710 = vmatprep.subr.bf16.mxu0 0
    %1711 = vmatpush1.bf16.msra.mxu0 0
    %1712 = vmatprep.subr.bf16.mxu0 0
    %1713 = vmatpush1.bf16.msra.mxu0 0
    %1714 = vmatprep.subr.bf16.mxu0 0
    %1715 = vmatpush1.bf16.msra.mxu0 %v1692
    %1716 = vmatprep.subr.bf16.mxu0 0
    %1717 = vmatpush2.bf16.msra.mxu0 0
    %1718 = vmatprep.subr.bf16.mxu0 0
    %1719 = vmatpush2.bf16.msra.mxu0 0
    %1720 = vmatprep.subr.bf16.mxu0 0
    %1721 = vmatpush2.bf16.msra.mxu0 0
    %1722 = vmatprep.subr.bf16.mxu0 0
    %1723 = vmatpush2.bf16.msra.mxu0 0
    %1724 = vmatprep.subr.bf16.mxu0 0
    %1725 = vmatpush2.bf16.msra.mxu0 0
    %1726 = vmatprep.subr.bf16.mxu0 0
    %1727 = vmatpush2.bf16.msra.mxu0 0
    %1728 = vmatprep.subr.bf16.mxu0 0
    %1729 = vmatpush2.bf16.msra.mxu0 0
    %1730 = vmatprep.subr.bf16.mxu0 0
    %1731 = vmatpush2.bf16.msra.mxu0 0
    %1732 = vmatprep.mubr.bf16.mxu0 0
    %1733 = vmatmul.mubr.bf16.gmra.mxu0 %v1695
    %v1734 = vpop.f32.mrf.mxu0
    %v1735 = vadd.f32 0.0, %v1734
    %v1736 = vpop.f32.mrf.mxu0
    %v1737 = vpop.f32.mrf.mxu0
    %v1738 = vadd.f32 0.0, %v1737
    %v1739 = vpop.f32.mrf.mxu0
    %1740 = vmatprep.mubr.bf16.mxu0 0
    %1741 = vmatmul.mubr.bf16.gmra.mxu0 %v1698
    %v1742 = vpop.f32.mrf.mxu0
    %v1743 = vadd.f32 0.0, %v1742
    %v1744 = vpop.f32.mrf.mxu0
    %v1745 = vpop.f32.mrf.mxu0
    %v1746 = vadd.f32 0.0, %v1745
    %v1747 = vpop.f32.mrf.mxu0
    %1748 = vdwg.mxu0
    %v1749 = vld [vmem:[#allocation3] sm:$0xff]
    %v1750 = vld [vmem:[#allocation3 + $0x8] sm:$0xff]
    %v1751 = vld [vmem:[#allocation3 + $0x10] sm:$0xff]
    %v1752 = vld [vmem:[#allocation3 + $0x18] sm:$0xff]
    %v1753 = vadd.f32 %v1749, %v1735
    %v1754 = vadd.f32 %v1750, %v1738
    %v1755 = vadd.f32 %v1751, %v1743
    %v1756 = vadd.f32 %v1752, %v1746
    %1757 = vst.msk [vmem:[#allocation3] sm:$0xff] %vm57, %v1753
    %1758 = vst.msk [vmem:[#allocation3 + $0x8] sm:$0xff] %vm57, %v1754
    %1759 = vst.msk [vmem:[#allocation3 + $0x10] sm:$0xff] %vm57, %v1755
    %1760 = vst.msk [vmem:[#allocation3 + $0x18] sm:$0xff] %vm57, %v1756
    %v1761 = vld [vmem:[#allocation2] sm:$0xf]
    %v1762 = vld [vmem:[#allocation2 + $0x8] sm:$0xf]
    %v1763 = vld [vmem:[#allocation2 + $0x10] sm:$0xf]
    %v1764 = vld [vmem:[#allocation2 + $0x18] sm:$0xf]
    %v1765 = vld [vmem:[#allocation2 + $0x4] sm:$0xf]
    %v1766 = vld [vmem:[#allocation2 + $0xc] sm:$0xf]
    %v1767 = vld [vmem:[#allocation2 + $0x14] sm:$0xf]
    %v1768 = vld [vmem:[#allocation2 + $0x1c] sm:$0xf]
    %v1770 = vunpack.c.l.b16 %v1761
    %v1771 = vpack.c.b16 %v1770, %v1770
    %1772 = vrot.lane.b32.xlu0 %v1771, 80
    %v1773 = vpop.permute.xlu0 %1772
    %1774 = vrot.lane.b32.xlu0 %v1771, 16
    %v1775 = vpop.permute.xlu0 %1774
    %v1777 = vsel %vm161, %v1773, 0
    %v1780 = vsel %vm161, %v1775, 0
    %1782 = vmatprep.subr.bf16.mxu0 0
    %1783 = vmatpush1.bf16.xpose.msra.mxu0 0
    %1784 = vmatprep.subr.bf16.mxu0 0
    %1785 = vmatpush1.bf16.xpose.msra.mxu0 0
    %1786 = vmatprep.subr.bf16.mxu0 0
    %1787 = vmatpush1.bf16.xpose.msra.mxu0 0
    %1788 = vmatprep.subr.bf16.mxu0 0
    %1789 = vmatpush1.bf16.xpose.msra.mxu0 0
    %1790 = vmatprep.subr.bf16.mxu0 0
    %1791 = vmatpush1.bf16.xpose.msra.mxu0 0
    %1792 = vmatprep.subr.bf16.mxu0 0
    %1793 = vmatpush1.bf16.xpose.msra.mxu0 0
    %1794 = vmatprep.subr.bf16.mxu0 0
    %1795 = vmatpush1.bf16.xpose.msra.mxu0 0
    %1796 = vmatprep.subr.bf16.mxu0 0
    %1797 = vmatpush1.bf16.xpose.msra.mxu0 %v1780
    %1798 = vmatprep.subr.bf16.mxu0 0
    %1799 = vmatpush2.bf16.xpose.msra.mxu0 0
    %1800 = vmatprep.subr.bf16.mxu0 0
    %1801 = vmatpush2.bf16.xpose.msra.mxu0 0
    %1802 = vmatprep.subr.bf16.mxu0 0
    %1803 = vmatpush2.bf16.xpose.msra.mxu0 0
    %1804 = vmatprep.subr.bf16.mxu0 0
    %1805 = vmatpush2.bf16.xpose.msra.mxu0 0
    %1806 = vmatprep.subr.bf16.mxu0 0
    %1807 = vmatpush2.bf16.xpose.msra.mxu0 0
    %1808 = vmatprep.subr.bf16.mxu0 0
    %1809 = vmatpush2.bf16.xpose.msra.mxu0 0
    %1810 = vmatprep.subr.bf16.mxu0 0
    %1811 = vmatpush2.bf16.xpose.msra.mxu0 0
    %1812 = vmatprep.subr.bf16.mxu0 0
    %1813 = vmatpush2.bf16.xpose.msra.mxu0 0
    %1814 = vmatprep.mubr.bf16.mxu0 0
    %1815 = vmatmul.mubr.bf16.gmra.mxu0 %v1777
    %v1816 = vpop.f32.mrf.mxu0
    %v1817 = vadd.f32 0.0, %v1816
    %v1818 = vpop.f32.mrf.mxu0
    %v1819 = vpop.f32.mrf.mxu0
    %v1820 = vpop.f32.mrf.mxu0
    %1821 = vdwg.mxu0
    %v1823 = vunpack.c.l.b16 %v1762
    %v1824 = vpack.c.b16 %v1823, %v1823
    %1825 = vrot.lane.b32.xlu0 %v1824, 80
    %v1826 = vpop.permute.xlu0 %1825
    %1827 = vrot.lane.b32.xlu0 %v1824, 16
    %v1828 = vpop.permute.xlu0 %1827
    %v1830 = vsel %vm161, %v1826, 0
    %v1833 = vsel %vm161, %v1828, 0
    %1835 = vmatprep.subr.bf16.mxu0 0
    %1836 = vmatpush1.bf16.xpose.msra.mxu0 0
    %1837 = vmatprep.subr.bf16.mxu0 0
    %1838 = vmatpush1.bf16.xpose.msra.mxu0 0
    %1839 = vmatprep.subr.bf16.mxu0 0
    %1840 = vmatpush1.bf16.xpose.msra.mxu0 0
    %1841 = vmatprep.subr.bf16.mxu0 0
    %1842 = vmatpush1.bf16.xpose.msra.mxu0 0
    %1843 = vmatprep.subr.bf16.mxu0 0
    %1844 = vmatpush1.bf16.xpose.msra.mxu0 0
    %1845 = vmatprep.subr.bf16.mxu0 0
    %1846 = vmatpush1.bf16.xpose.msra.mxu0 0
    %1847 = vmatprep.subr.bf16.mxu0 0
    %1848 = vmatpush1.bf16.xpose.msra.mxu0 0
    %1849 = vmatprep.subr.bf16.mxu0 0
    %1850 = vmatpush1.bf16.xpose.msra.mxu0 %v1833
    %1851 = vmatprep.subr.bf16.mxu0 0
    %1852 = vmatpush2.bf16.xpose.msra.mxu0 0
    %1853 = vmatprep.subr.bf16.mxu0 0
    %1854 = vmatpush2.bf16.xpose.msra.mxu0 0
    %1855 = vmatprep.subr.bf16.mxu0 0
    %1856 = vmatpush2.bf16.xpose.msra.mxu0 0
    %1857 = vmatprep.subr.bf16.mxu0 0
    %1858 = vmatpush2.bf16.xpose.msra.mxu0 0
    %1859 = vmatprep.subr.bf16.mxu0 0
    %1860 = vmatpush2.bf16.xpose.msra.mxu0 0
    %1861 = vmatprep.subr.bf16.mxu0 0
    %1862 = vmatpush2.bf16.xpose.msra.mxu0 0
    %1863 = vmatprep.subr.bf16.mxu0 0
    %1864 = vmatpush2.bf16.xpose.msra.mxu0 0
    %1865 = vmatprep.subr.bf16.mxu0 0
    %1866 = vmatpush2.bf16.xpose.msra.mxu0 0
    %1867 = vmatprep.mubr.bf16.mxu0 0
    %1868 = vmatmul.mubr.bf16.gmra.mxu0 %v1830
    %v1869 = vpop.f32.mrf.mxu0
    %v1870 = vadd.f32 0.0, %v1869
    %v1871 = vpop.f32.mrf.mxu0
    %v1872 = vpop.f32.mrf.mxu0
    %v1873 = vpop.f32.mrf.mxu0
    %1874 = vdwg.mxu0
    %v1876 = vunpack.c.l.b16 %v1763
    %v1877 = vpack.c.b16 %v1876, %v1876
    %1878 = vrot.lane.b32.xlu0 %v1877, 80
    %v1879 = vpop.permute.xlu0 %1878
    %1880 = vrot.lane.b32.xlu0 %v1877, 16
    %v1881 = vpop.permute.xlu0 %1880
    %v1883 = vsel %vm161, %v1879, 0
    %v1886 = vsel %vm161, %v1881, 0
    %1888 = vmatprep.subr.bf16.mxu0 0
    %1889 = vmatpush1.bf16.xpose.msra.mxu0 0
    %1890 = vmatprep.subr.bf16.mxu0 0
    %1891 = vmatpush1.bf16.xpose.msra.mxu0 0
    %1892 = vmatprep.subr.bf16.mxu0 0
    %1893 = vmatpush1.bf16.xpose.msra.mxu0 0
    %1894 = vmatprep.subr.bf16.mxu0 0
    %1895 = vmatpush1.bf16.xpose.msra.mxu0 0
    %1896 = vmatprep.subr.bf16.mxu0 0
    %1897 = vmatpush1.bf16.xpose.msra.mxu0 0
    %1898 = vmatprep.subr.bf16.mxu0 0
    %1899 = vmatpush1.bf16.xpose.msra.mxu0 0
    %1900 = vmatprep.subr.bf16.mxu0 0
    %1901 = vmatpush1.bf16.xpose.msra.mxu0 0
    %1902 = vmatprep.subr.bf16.mxu0 0
    %1903 = vmatpush1.bf16.xpose.msra.mxu0 %v1886
    %1904 = vmatprep.subr.bf16.mxu0 0
    %1905 = vmatpush2.bf16.xpose.msra.mxu0 0
    %1906 = vmatprep.subr.bf16.mxu0 0
    %1907 = vmatpush2.bf16.xpose.msra.mxu0 0
    %1908 = vmatprep.subr.bf16.mxu0 0
    %1909 = vmatpush2.bf16.xpose.msra.mxu0 0
    %1910 = vmatprep.subr.bf16.mxu0 0
    %1911 = vmatpush2.bf16.xpose.msra.mxu0 0
    %1912 = vmatprep.subr.bf16.mxu0 0
    %1913 = vmatpush2.bf16.xpose.msra.mxu0 0
    %1914 = vmatprep.subr.bf16.mxu0 0
    %1915 = vmatpush2.bf16.xpose.msra.mxu0 0
    %1916 = vmatprep.subr.bf16.mxu0 0
    %1917 = vmatpush2.bf16.xpose.msra.mxu0 0
    %1918 = vmatprep.subr.bf16.mxu0 0
    %1919 = vmatpush2.bf16.xpose.msra.mxu0 0
    %1920 = vmatprep.mubr.bf16.mxu0 0
    %1921 = vmatmul.mubr.bf16.gmra.mxu0 %v1883
    %v1922 = vpop.f32.mrf.mxu0
    %v1923 = vadd.f32 0.0, %v1922
    %v1924 = vpop.f32.mrf.mxu0
    %v1925 = vpop.f32.mrf.mxu0
    %v1926 = vpop.f32.mrf.mxu0
    %1927 = vdwg.mxu0
    %v1929 = vunpack.c.l.b16 %v1764
    %v1930 = vpack.c.b16 %v1929, %v1929
    %1931 = vrot.lane.b32.xlu0 %v1930, 80
    %v1932 = vpop.permute.xlu0 %1931
    %1933 = vrot.lane.b32.xlu0 %v1930, 16
    %v1934 = vpop.permute.xlu0 %1933
    %v1936 = vsel %vm161, %v1932, 0
    %v1939 = vsel %vm161, %v1934, 0
    %1941 = vmatprep.subr.bf16.mxu0 0
    %1942 = vmatpush1.bf16.xpose.msra.mxu0 0
    %1943 = vmatprep.subr.bf16.mxu0 0
    %1944 = vmatpush1.bf16.xpose.msra.mxu0 0
    %1945 = vmatprep.subr.bf16.mxu0 0
    %1946 = vmatpush1.bf16.xpose.msra.mxu0 0
    %1947 = vmatprep.subr.bf16.mxu0 0
    %1948 = vmatpush1.bf16.xpose.msra.mxu0 0
    %1949 = vmatprep.subr.bf16.mxu0 0
    %1950 = vmatpush1.bf16.xpose.msra.mxu0 0
    %1951 = vmatprep.subr.bf16.mxu0 0
    %1952 = vmatpush1.bf16.xpose.msra.mxu0 0
    %1953 = vmatprep.subr.bf16.mxu0 0
    %1954 = vmatpush1.bf16.xpose.msra.mxu0 0
    %1955 = vmatprep.subr.bf16.mxu0 0
    %1956 = vmatpush1.bf16.xpose.msra.mxu0 %v1939
    %1957 = vmatprep.subr.bf16.mxu0 0
    %1958 = vmatpush2.bf16.xpose.msra.mxu0 0
    %1959 = vmatprep.subr.bf16.mxu0 0
    %1960 = vmatpush2.bf16.xpose.msra.mxu0 0
    %1961 = vmatprep.subr.bf16.mxu0 0
    %1962 = vmatpush2.bf16.xpose.msra.mxu0 0
    %1963 = vmatprep.subr.bf16.mxu0 0
    %1964 = vmatpush2.bf16.xpose.msra.mxu0 0
    %1965 = vmatprep.subr.bf16.mxu0 0
    %1966 = vmatpush2.bf16.xpose.msra.mxu0 0
    %1967 = vmatprep.subr.bf16.mxu0 0
    %1968 = vmatpush2.bf16.xpose.msra.mxu0 0
    %1969 = vmatprep.subr.bf16.mxu0 0
    %1970 = vmatpush2.bf16.xpose.msra.mxu0 0
    %1971 = vmatprep.subr.bf16.mxu0 0
    %1972 = vmatpush2.bf16.xpose.msra.mxu0 0
    %1973 = vmatprep.mubr.bf16.mxu0 0
    %1974 = vmatmul.mubr.bf16.gmra.mxu0 %v1936
    %v1975 = vpop.f32.mrf.mxu0
    %v1976 = vadd.f32 0.0, %v1975
    %v1977 = vpop.f32.mrf.mxu0
    %v1978 = vpop.f32.mrf.mxu0
    %v1979 = vpop.f32.mrf.mxu0
    %1980 = vdwg.mxu0
    %v1981 = vsel %vm361, %v1817, -inf
    %1982 = vmax.xlane.f32.xlu0 %v1981
    %v1983 = vpop.xlane.xlu0 %1982
    %v1984 = vsel %vm361, %v1870, -inf
    %1985 = vmax.xlane.f32.xlu0 %v1984
    %v1986 = vpop.xlane.xlu0 %1985
    %v1987 = vsel %vm361, %v1923, -inf
    %1988 = vmax.xlane.f32.xlu0 %v1987
    %v1989 = vpop.xlane.xlu0 %1988
    %v1990 = vsel %vm361, %v1976, -inf
    %1991 = vmax.xlane.f32.xlu0 %v1990
    %v1992 = vpop.xlane.xlu0 %1991
    %v1993 = vsub.f32 %v1817, %v1983
    %v1994 = vsub.f32 %v1870, %v1986
    %v1995 = vsub.f32 %v1923, %v1989
    %v1996 = vsub.f32 %v1976, %v1992
    %v1997 = vmul.f32 %v1993, 1.442695
    %v1998 = vpow.pop %v1997
    %v1999 = vmul.f32 %v1994, 1.442695
    %v2000 = vpow.pop %v1999
    %v2001 = vmul.f32 %v1995, 1.442695
    %v2002 = vpow.pop %v2001
    %v2003 = vmul.f32 %v1996, 1.442695
    %v2004 = vpow.pop %v2003
    %v2005 = vsel %vm361, %v1998, 0.0
    %2006 = vadd.xlane.f32.xlu0 %v2005
    %v2007 = vpop.xlane.xlu0 %2006
    %v2008 = vsel %vm361, %v2000, 0.0
    %2009 = vadd.xlane.f32.xlu0 %v2008
    %v2010 = vpop.xlane.xlu0 %2009
    %v2011 = vsel %vm361, %v2002, 0.0
    %2012 = vadd.xlane.f32.xlu0 %v2011
    %v2013 = vpop.xlane.xlu0 %2012
    %v2014 = vsel %vm361, %v2004, 0.0
    %2015 = vadd.xlane.f32.xlu0 %v2014
    %v2016 = vpop.xlane.xlu0 %2015
    %v2017 = vpack.c.bf16 %v1998, %v1998
    %v2018 = vpack.c.bf16 %v2000, %v2000
    %v2019 = vpack.c.bf16 %v2002, %v2002
    %v2020 = vpack.c.bf16 %v2004, %v2004
    %v2022 = vunpack.c.l.b16 %v1765
    %v2023 = vpack.c.b16 %v2022, %v2022
    %2024 = vrot.lane.b32.xlu0 %v2023, 80
    %v2025 = vpop.permute.xlu0 %2024
    %v2027 = vsel %vm361, %v2017, 0
    %v2030 = vsel %vm141, %v2025, 0
    %2032 = vmatprep.subr.bf16.mxu0 0
    %2033 = vmatpush1.bf16.msra.mxu0 0
    %2034 = vmatprep.subr.bf16.mxu0 0
    %2035 = vmatpush1.bf16.msra.mxu0 0
    %2036 = vmatprep.subr.bf16.mxu0 0
    %2037 = vmatpush1.bf16.msra.mxu0 0
    %2038 = vmatprep.subr.bf16.mxu0 0
    %2039 = vmatpush1.bf16.msra.mxu0 0
    %2040 = vmatprep.subr.bf16.mxu0 0
    %2041 = vmatpush1.bf16.msra.mxu0 0
    %2042 = vmatprep.subr.bf16.mxu0 0
    %2043 = vmatpush1.bf16.msra.mxu0 0
    %2044 = vmatprep.subr.bf16.mxu0 0
    %2045 = vmatpush1.bf16.msra.mxu0 0
    %2046 = vmatprep.subr.bf16.mxu0 0
    %2047 = vmatpush1.bf16.msra.mxu0 %v2030
    %2048 = vmatprep.subr.bf16.mxu0 0
    %2049 = vmatpush2.bf16.msra.mxu0 0
    %2050 = vmatprep.subr.bf16.mxu0 0
    %2051 = vmatpush2.bf16.msra.mxu0 0
    %2052 = vmatprep.subr.bf16.mxu0 0
    %2053 = vmatpush2.bf16.msra.mxu0 0
    %2054 = vmatprep.subr.bf16.mxu0 0
    %2055 = vmatpush2.bf16.msra.mxu0 0
    %2056 = vmatprep.subr.bf16.mxu0 0
    %2057 = vmatpush2.bf16.msra.mxu0 0
    %2058 = vmatprep.subr.bf16.mxu0 0
    %2059 = vmatpush2.bf16.msra.mxu0 0
    %2060 = vmatprep.subr.bf16.mxu0 0
    %2061 = vmatpush2.bf16.msra.mxu0 0
    %2062 = vmatprep.subr.bf16.mxu0 0
    %2063 = vmatpush2.bf16.msra.mxu0 0
    %2064 = vmatprep.mubr.bf16.mxu0 0
    %2065 = vmatmul.mubr.bf16.gmra.mxu0 %v2027
    %v2066 = vpop.f32.mrf.mxu0
    %v2067 = vadd.f32 0.0, %v2066
    %v2068 = vpop.f32.mrf.mxu0
    %v2069 = vpop.f32.mrf.mxu0
    %v2070 = vpop.f32.mrf.mxu0
    %2071 = vdwg.mxu0
    %v2073 = vunpack.c.l.b16 %v1766
    %v2074 = vpack.c.b16 %v2073, %v2073
    %2075 = vrot.lane.b32.xlu0 %v2074, 80
    %v2076 = vpop.permute.xlu0 %2075
    %v2078 = vsel %vm361, %v2018, 0
    %v2081 = vsel %vm141, %v2076, 0
    %2083 = vmatprep.subr.bf16.mxu0 0
    %2084 = vmatpush1.bf16.msra.mxu0 0
    %2085 = vmatprep.subr.bf16.mxu0 0
    %2086 = vmatpush1.bf16.msra.mxu0 0
    %2087 = vmatprep.subr.bf16.mxu0 0
    %2088 = vmatpush1.bf16.msra.mxu0 0
    %2089 = vmatprep.subr.bf16.mxu0 0
    %2090 = vmatpush1.bf16.msra.mxu0 0
    %2091 = vmatprep.subr.bf16.mxu0 0
    %2092 = vmatpush1.bf16.msra.mxu0 0
    %2093 = vmatprep.subr.bf16.mxu0 0
    %2094 = vmatpush1.bf16.msra.mxu0 0
    %2095 = vmatprep.subr.bf16.mxu0 0
    %2096 = vmatpush1.bf16.msra.mxu0 0
    %2097 = vmatprep.subr.bf16.mxu0 0
    %2098 = vmatpush1.bf16.msra.mxu0 %v2081
    %2099 = vmatprep.subr.bf16.mxu0 0
    %2100 = vmatpush2.bf16.msra.mxu0 0
    %2101 = vmatprep.subr.bf16.mxu0 0
    %2102 = vmatpush2.bf16.msra.mxu0 0
    %2103 = vmatprep.subr.bf16.mxu0 0
    %2104 = vmatpush2.bf16.msra.mxu0 0
    %2105 = vmatprep.subr.bf16.mxu0 0
    %2106 = vmatpush2.bf16.msra.mxu0 0
    %2107 = vmatprep.subr.bf16.mxu0 0
    %2108 = vmatpush2.bf16.msra.mxu0 0
    %2109 = vmatprep.subr.bf16.mxu0 0
    %2110 = vmatpush2.bf16.msra.mxu0 0
    %2111 = vmatprep.subr.bf16.mxu0 0
    %2112 = vmatpush2.bf16.msra.mxu0 0
    %2113 = vmatprep.subr.bf16.mxu0 0
    %2114 = vmatpush2.bf16.msra.mxu0 0
    %2115 = vmatprep.mubr.bf16.mxu0 0
    %2116 = vmatmul.mubr.bf16.gmra.mxu0 %v2078
    %v2117 = vpop.f32.mrf.mxu0
    %v2118 = vadd.f32 0.0, %v2117
    %v2119 = vpop.f32.mrf.mxu0
    %v2120 = vpop.f32.mrf.mxu0
    %v2121 = vpop.f32.mrf.mxu0
    %2122 = vdwg.mxu0
    %v2124 = vunpack.c.l.b16 %v1767
    %v2125 = vpack.c.b16 %v2124, %v2124
    %2126 = vrot.lane.b32.xlu0 %v2125, 80
    %v2127 = vpop.permute.xlu0 %2126
    %v2129 = vsel %vm361, %v2019, 0
    %v2132 = vsel %vm141, %v2127, 0
    %2134 = vmatprep.subr.bf16.mxu0 0
    %2135 = vmatpush1.bf16.msra.mxu0 0
    %2136 = vmatprep.subr.bf16.mxu0 0
    %2137 = vmatpush1.bf16.msra.mxu0 0
    %2138 = vmatprep.subr.bf16.mxu0 0
    %2139 = vmatpush1.bf16.msra.mxu0 0
    %2140 = vmatprep.subr.bf16.mxu0 0
    %2141 = vmatpush1.bf16.msra.mxu0 0
    %2142 = vmatprep.subr.bf16.mxu0 0
    %2143 = vmatpush1.bf16.msra.mxu0 0
    %2144 = vmatprep.subr.bf16.mxu0 0
    %2145 = vmatpush1.bf16.msra.mxu0 0
    %2146 = vmatprep.subr.bf16.mxu0 0
    %2147 = vmatpush1.bf16.msra.mxu0 0
    %2148 = vmatprep.subr.bf16.mxu0 0
    %2149 = vmatpush1.bf16.msra.mxu0 %v2132
    %2150 = vmatprep.subr.bf16.mxu0 0
    %2151 = vmatpush2.bf16.msra.mxu0 0
    %2152 = vmatprep.subr.bf16.mxu0 0
    %2153 = vmatpush2.bf16.msra.mxu0 0
    %2154 = vmatprep.subr.bf16.mxu0 0
    %2155 = vmatpush2.bf16.msra.mxu0 0
    %2156 = vmatprep.subr.bf16.mxu0 0
    %2157 = vmatpush2.bf16.msra.mxu0 0
    %2158 = vmatprep.subr.bf16.mxu0 0
    %2159 = vmatpush2.bf16.msra.mxu0 0
    %2160 = vmatprep.subr.bf16.mxu0 0
    %2161 = vmatpush2.bf16.msra.mxu0 0
    %2162 = vmatprep.subr.bf16.mxu0 0
    %2163 = vmatpush2.bf16.msra.mxu0 0
    %2164 = vmatprep.subr.bf16.mxu0 0
    %2165 = vmatpush2.bf16.msra.mxu0 0
    %2166 = vmatprep.mubr.bf16.mxu0 0
    %2167 = vmatmul.mubr.bf16.gmra.mxu0 %v2129
    %v2168 = vpop.f32.mrf.mxu0
    %v2169 = vadd.f32 0.0, %v2168
    %v2170 = vpop.f32.mrf.mxu0
    %v2171 = vpop.f32.mrf.mxu0
    %v2172 = vpop.f32.mrf.mxu0
    %2173 = vdwg.mxu0
    %v2175 = vunpack.c.l.b16 %v1768
    %v2176 = vpack.c.b16 %v2175, %v2175
    %2177 = vrot.lane.b32.xlu0 %v2176, 80
    %v2178 = vpop.permute.xlu0 %2177
    %v2180 = vsel %vm361, %v2020, 0
    %v2183 = vsel %vm141, %v2178, 0
    %2185 = vmatprep.subr.bf16.mxu0 0
    %2186 = vmatpush1.bf16.msra.mxu0 0
    %2187 = vmatprep.subr.bf16.mxu0 0
    %2188 = vmatpush1.bf16.msra.mxu0 0
    %2189 = vmatprep.subr.bf16.mxu0 0
    %2190 = vmatpush1.bf16.msra.mxu0 0
    %2191 = vmatprep.subr.bf16.mxu0 0
    %2192 = vmatpush1.bf16.msra.mxu0 0
    %2193 = vmatprep.subr.bf16.mxu0 0
    %2194 = vmatpush1.bf16.msra.mxu0 0
    %2195 = vmatprep.subr.bf16.mxu0 0
    %2196 = vmatpush1.bf16.msra.mxu0 0
    %2197 = vmatprep.subr.bf16.mxu0 0
    %2198 = vmatpush1.bf16.msra.mxu0 0
    %2199 = vmatprep.subr.bf16.mxu0 0
    %2200 = vmatpush1.bf16.msra.mxu0 %v2183
    %2201 = vmatprep.subr.bf16.mxu0 0
    %2202 = vmatpush2.bf16.msra.mxu0 0
    %2203 = vmatprep.subr.bf16.mxu0 0
    %2204 = vmatpush2.bf16.msra.mxu0 0
    %2205 = vmatprep.subr.bf16.mxu0 0
    %2206 = vmatpush2.bf16.msra.mxu0 0
    %2207 = vmatprep.subr.bf16.mxu0 0
    %2208 = vmatpush2.bf16.msra.mxu0 0
    %2209 = vmatprep.subr.bf16.mxu0 0
    %2210 = vmatpush2.bf16.msra.mxu0 0
    %2211 = vmatprep.subr.bf16.mxu0 0
    %2212 = vmatpush2.bf16.msra.mxu0 0
    %2213 = vmatprep.subr.bf16.mxu0 0
    %2214 = vmatpush2.bf16.msra.mxu0 0
    %2215 = vmatprep.subr.bf16.mxu0 0
    %2216 = vmatpush2.bf16.msra.mxu0 0
    %2217 = vmatprep.mubr.bf16.mxu0 0
    %2218 = vmatmul.mubr.bf16.gmra.mxu0 %v2180
    %v2219 = vpop.f32.mrf.mxu0
    %v2220 = vadd.f32 0.0, %v2219
    %v2221 = vpop.f32.mrf.mxu0
    %v2222 = vpop.f32.mrf.mxu0
    %v2223 = vpop.f32.mrf.mxu0
    %2224 = vdwg.mxu0
    %v2225 = vrcp.pop %v2007
    %v2226 = vrcp.pop %v2010
    %v2227 = vrcp.pop %v2013
    %v2228 = vrcp.pop %v2016
    %v2229 = vmul.f32 %v2067, %v2225
    %v2230 = vmul.f32 %v2118, %v2226
    %v2231 = vmul.f32 %v2169, %v2227
    %v2232 = vmul.f32 %v2220, %v2228
    %v2233 = vpack.c.bf16 %v2230, %v2229
    %v2234 = vpack.c.bf16 %v2232, %v2231
    %v2235 = vld [vmem:[%s2 + $0x18] sm:$0xf]
    %v2236 = vld [vmem:[%s2 + $0x1c] sm:$0xf]
    %v2239 = vunpack.c.l.b16 %v2235
    %v2240 = vunpack.c.l.b16 %v2236
    %v2241 = vpack.c.b16 %v2240, %v2239
    %v2244 = vsel %vm161, %v2233, 0
    %v2247 = vsel %vm161, %v2234, 0
    %2249 = vmatprep.subr.bf16.mxu0 0
    %2250 = vmatpush1.bf16.msra.mxu0 0
    %2251 = vmatprep.subr.bf16.mxu0 0
    %2252 = vmatpush1.bf16.msra.mxu0 0
    %2253 = vmatprep.subr.bf16.mxu0 0
    %2254 = vmatpush1.bf16.msra.mxu0 0
    %2255 = vmatprep.subr.bf16.mxu0 0
    %2256 = vmatpush1.bf16.msra.mxu0 0
    %2257 = vmatprep.subr.bf16.mxu0 0
    %2258 = vmatpush1.bf16.msra.mxu0 0
    %2259 = vmatprep.subr.bf16.mxu0 0
    %2260 = vmatpush1.bf16.msra.mxu0 0
    %2261 = vmatprep.subr.bf16.mxu0 0
    %2262 = vmatpush1.bf16.msra.mxu0 0
    %2263 = vmatprep.subr.bf16.mxu0 0
    %2264 = vmatpush1.bf16.msra.mxu0 %v2241
    %2265 = vmatprep.subr.bf16.mxu0 0
    %2266 = vmatpush2.bf16.msra.mxu0 0
    %2267 = vmatprep.subr.bf16.mxu0 0
    %2268 = vmatpush2.bf16.msra.mxu0 0
    %2269 = vmatprep.subr.bf16.mxu0 0
    %2270 = vmatpush2.bf16.msra.mxu0 0
    %2271 = vmatprep.subr.bf16.mxu0 0
    %2272 = vmatpush2.bf16.msra.mxu0 0
    %2273 = vmatprep.subr.bf16.mxu0 0
    %2274 = vmatpush2.bf16.msra.mxu0 0
    %2275 = vmatprep.subr.bf16.mxu0 0
    %2276 = vmatpush2.bf16.msra.mxu0 0
    %2277 = vmatprep.subr.bf16.mxu0 0
    %2278 = vmatpush2.bf16.msra.mxu0 0
    %2279 = vmatprep.subr.bf16.mxu0 0
    %2280 = vmatpush2.bf16.msra.mxu0 0
    %2281 = vmatprep.mubr.bf16.mxu0 0
    %2282 = vmatmul.mubr.bf16.gmra.mxu0 %v2244
    %v2283 = vpop.f32.mrf.mxu0
    %v2284 = vadd.f32 0.0, %v2283
    %v2285 = vpop.f32.mrf.mxu0
    %v2286 = vpop.f32.mrf.mxu0
    %v2287 = vadd.f32 0.0, %v2286
    %v2288 = vpop.f32.mrf.mxu0
    %2289 = vmatprep.mubr.bf16.mxu0 0
    %2290 = vmatmul.mubr.bf16.gmra.mxu0 %v2247
    %v2291 = vpop.f32.mrf.mxu0
    %v2292 = vadd.f32 0.0, %v2291
    %v2293 = vpop.f32.mrf.mxu0
    %v2294 = vpop.f32.mrf.mxu0
    %v2295 = vadd.f32 0.0, %v2294
    %v2296 = vpop.f32.mrf.mxu0
    %2297 = vdwg.mxu0
    %v2298 = vld [vmem:[#allocation3] sm:$0xff]
    %v2299 = vld [vmem:[#allocation3 + $0x8] sm:$0xff]
    %v2300 = vld [vmem:[#allocation3 + $0x10] sm:$0xff]
    %v2301 = vld [vmem:[#allocation3 + $0x18] sm:$0xff]
    %v2302 = vadd.f32 %v2298, %v2284
    %v2303 = vadd.f32 %v2299, %v2287
    %v2304 = vadd.f32 %v2300, %v2292
    %v2305 = vadd.f32 %v2301, %v2295
    %2306 = vst.msk [vmem:[#allocation3] sm:$0xff] %vm57, %v2302
    %2307 = vst.msk [vmem:[#allocation3 + $0x8] sm:$0xff] %vm57, %v2303
    %2308 = vst.msk [vmem:[#allocation3 + $0x10] sm:$0xff] %vm57, %v2304
    %2309 = vst.msk [vmem:[#allocation3 + $0x18] sm:$0xff] %vm57, %v2305
    %v2310 = vld [vmem:[#allocation3] sm:$0xff]
    %v2311 = vld [vmem:[#allocation3 + $0x8] sm:$0xff]
    %v2312 = vld [vmem:[#allocation3 + $0x10] sm:$0xff]
    %v2313 = vld [vmem:[#allocation3 + $0x18] sm:$0xff]
    %v2314 = vld [vmem:[%s3] sm:$0x1]
    %v2316 = vlaneseq
    %v2317 = vshrl.u32 %v2316, 7
    %v2318 = vsub.s32 0, %v2317
    %v2319 = vrot.slane %v2314, %v2318
    %v2321 = vadd.f32 %v2310, %v2319
    %v2322 = vadd.f32 %v2311, %v2319
    %v2323 = vadd.f32 %v2312, %v2319
    %v2324 = vadd.f32 %v2313, %v2319
    %v2325 = vpack.c.bf16 %v2321, %v2321
    %v2326 = vpack.c.bf16 %v2322, %v2322
    %v2327 = vpack.c.bf16 %v2323, %v2323
    %v2328 = vpack.c.bf16 %v2324, %v2324
    %vm2329 = vcmask 257024
    %2330 = vst.msk [vmem:[#allocation4] sm:$0xf] %vm2329, %v2325
    %2331 = vst.msk [vmem:[#allocation4 + $0x4] sm:$0xf] %vm2329, %v2326
    %2332 = vst.msk [vmem:[#allocation4 + $0x8] sm:$0xf] %vm2329, %v2327
    %2333 = vst.msk [vmem:[#allocation4 + $0xc] sm:$0xf] %vm2329, %v2328
    // Predicated region
    $region18: #{tpu_custom_call.1} parent=1 // pred_check
      _
    $region19: #{tpu_custom_call.1} parent=1 // pred_check_branch
      %2335 = sbr.rel (0) target = $region21
    $region20: #{tpu_custom_call.1} parent=1 // pred_region
      %s2337 = ssub.s32 256, 256
      %2338 = vsyncadd [#allocation5], %s2337
      %s2339 = sshll.u32 [#allocation4], 4
      %s2340 = int_to_ptr.vmem [resolvable:$true] %s2339
      %2345 = dma.vmem_to_hbm [thread:$0]  %s2340, 256, %s4, [#allocation5], 64, 64, 4
    $region21: #{tpu_custom_call.1} parent=1 // pred_fallthru
      _
    // Predicated region
    $region22: #{tpu_custom_call.1} parent=1 // pred_check
      _
    $region23: #{tpu_custom_call.1} parent=1 // pred_check_branch
      %2347 = sbr.rel (0) target = $region25
    $region24: #{tpu_custom_call.1} parent=1 // pred_region
      %2348 = dma.done [#allocation5], 256
    $region25: #{tpu_custom_call.1} parent=1 // pred_fallthru
      _
    %2349 = vsyncpa [#allocation5], 1

</llo_original>
